<compile_context>
chip_gen: v5e
topology: v5e:2x2
jax: 0.10.0
libtpu: 0.0.40
codegen_flags: <defaults>
</compile_context>

<pallas_src>
import functools

import jax
import jax.numpy as jnp
from jax import lax
from jax.experimental import pallas as pl
from jax.experimental.pallas import tpu as pltpu


def _round_up(x, m):
    return ((x + m - 1) // m) * m


def _gru_fc_kernel(x2_ref, wih_ref, whh_ref, b_ref, wfc_ref, bfc_ref, h0_ref,
                   q_ref, hout_ref,
                   gi_s, hseq_s,
                   *, T, B_pad, G, bulk_dtype):
    """GRU + FC, single invocation (everything is VMEM-resident at these sizes).

    x2_ref   : (T*B_pad, I)     time-major input, rows ordered (t, b)
    wih_ref  : (I, 3G)          input weights, gates [r|z|n] each padded to G lanes
    whh_ref  : (G, 3G)          recurrent weights, same per-gate lane blocks
    b_ref    : (2, 3G)          row 0: input-side bias (r/z folded with hh bias,
                                n slot = b_in); row 1: hh-side bias (only the n
                                slot = b_hn is non-zero, kept inside r*(...))
    wfc_ref  : (G, O_pad)       fc weights, transposed + padded
    bfc_ref  : (1, O_pad)
    h0_ref   : (B_pad, G)       initial hidden state, lanes H..G-1 are zero
    q_ref    : (T*B_pad, O_pad) q-values (lane-dense output slab)
    hout_ref : (B_pad, G)       final hidden state
    gi_s     : (T*B_pad, 3G)    scratch: hoisted fused input projection
    hseq_s   : (T*B_pad, G)     scratch: per-step hidden states
    """
    G2, G3 = 2 * G, 3 * G

    # ---- Hoisted, fused input projection: ONE matmul, ONE lane-dense store
    # ---- (3G is a multiple of 128 -> unmasked vst), bias folded in. ----
    gi_s[...] = (jnp.dot(x2_ref[...].astype(bulk_dtype),
                         wih_ref[...].astype(bulk_dtype),
                         preferred_element_type=jnp.float32)
                 + b_ref[0:1, :])

    # Loop-invariant broadcast hoisted above the time loop (not CSE'd by JAX).
    bhh_b = jnp.broadcast_to(b_ref[1:2, :], (B_pad, G3))

    def step(t, h):
        if isinstance(t, int):
            base = t * B_pad                       # static, fully unrolled path
        else:
            base = pl.multiple_of(t * B_pad, B_pad)
        gi_t = gi_s[pl.ds(base, B_pad), :]         # (B_pad, 3G), one aligned load

        # ONE fused recurrent matmul on the serial critical path. The weight is
        # re-read from VMEM inside the step (vld slots are idle) so it is not
        # pinned in vregs across the whole unrolled loop.
        gh = jnp.dot(h, whh_ref[...], preferred_element_type=jnp.float32) + bhh_b

        # Single EUP sigmoid pass over the contiguous r|z block, then static
        # 128-lane-aligned slices.
        rz = jax.nn.sigmoid(gi_t[:, :G2] + gh[:, :G2])
        r = rz[:, :G]
        z = rz[:, G:]
        n = jnp.tanh(gi_t[:, G2:] + r * gh[:, G2:])
        h_new = (1.0 - z) * n + z * h              # (B_pad, G); padded lanes stay 0

        hseq_s[pl.ds(base, B_pad), :] = h_new
        return h_new

    h = h0_ref[...]
    if T <= 32:
        # T is a compile-time constant: full static unroll -> constant slice
        # offsets and full LLO scheduler visibility.
        for t in range(T):
            h = step(t, h)
        h_final = h
    else:
        h_final = lax.fori_loop(0, T, step, h, unroll=8 if G <= 128 else 4)
    hout_ref[...] = h_final.astype(hout_ref.dtype)

    # ---- Hoisted FC: one big matmul + one lane-dense bulk store. ----
    q_ref[...] = (jnp.dot(hseq_s[...].astype(bulk_dtype),
                          wfc_ref[...].astype(bulk_dtype),
                          preferred_element_type=jnp.float32)
                  + bfc_ref[...]).astype(q_ref.dtype)


def prepare_params(params, lane=128):
    """One-time weight prep: transpose, per-gate split, lane-pad each gate to its
    own 128-lane block, concatenate, fold r/z biases. Keeps repeated forward
    calls free of per-call weight reshuffling and cuts entry DMAs to 7."""
    w_ih = params["w_ih"].astype(jnp.float32)   # (3H, I), gate order r,z,n
    w_hh = params["w_hh"].astype(jnp.float32)   # (3H, H)
    b_ih = params["b_ih"].astype(jnp.float32)   # (3H,)
    b_hh = params["b_hh"].astype(jnp.float32)   # (3H,)
    w_fc = params["w_fc"].astype(jnp.float32)   # (O, H)
    b_fc = params["b_fc"].astype(jnp.float32)   # (O,)

    H = w_hh.shape[1]
    I = w_ih.shape[1]
    O = w_fc.shape[0]
    G = _round_up(max(H, lane), lane)           # per-gate lane-padded width
    O_pad = _round_up(max(O, lane), lane)

    def ih_gate(g):                              # (I, G), zero-padded columns
        return jnp.pad(jnp.transpose(w_ih[g * H:(g + 1) * H, :]),
                       ((0, 0), (0, G - H)))

    def hh_gate(g):                              # (G, G), zero rows & columns pad
        return jnp.pad(jnp.transpose(w_hh[g * H:(g + 1) * H, :]),
                       ((0, G - H), (0, G - H)))

    wih_cat = jnp.concatenate([ih_gate(g) for g in range(3)], axis=1)   # (I, 3G)
    whh_cat = jnp.concatenate([hh_gate(g) for g in range(3)], axis=1)   # (G, 3G)

    def pad_vec(v):
        return jnp.pad(v, (0, G - H))

    # Row 0: input-side bias; r/z get (b_ih + b_hh) folded, n keeps only b_in.
    b_gi = jnp.concatenate([pad_vec(b_ih[0:H] + b_hh[0:H]),
                            pad_vec(b_ih[H:2 * H] + b_hh[H:2 * H]),
                            pad_vec(b_ih[2 * H:3 * H])])
    # Row 1: recurrent-side bias; only the n slot (b_hn) is non-zero, it must
    # stay inside r * (W_hn h + b_hn) per PyTorch GRU semantics.
    b_hh_row = jnp.concatenate([jnp.zeros((2 * G,), jnp.float32),
                                pad_vec(b_hh[2 * H:3 * H])])
    biases = jnp.stack([b_gi, b_hh_row], axis=0)                         # (2, 3G)

    wfc = jnp.pad(jnp.transpose(w_fc), ((0, G - H), (0, O_pad - O)))     # (G, O_pad)
    bfc = jnp.pad(b_fc, (0, O_pad - O)).reshape(1, O_pad)

    return {"H": H, "I": I, "O": O, "G": G, "O_pad": O_pad,
            "wih_cat": wih_cat, "whh_cat": whh_cat, "biases": biases,
            "wfc": wfc, "bfc": bfc}


def qnetwork_forward(x, prep, hidden=None, bulk_matmul_dtype=jnp.float32):
    """x: (B, T, input_dim) float32 (batch_first, like nn.GRU(batch_first=True)).

    Returns (q, hidden) with q: (B, T, output_dim), hidden: (1, B, hidden_dim).
    bulk_matmul_dtype=jnp.bfloat16 enables bf16 MXU inputs for the two bulk
    (non-recurrent) matmuls on v6e/v7x; the recurrence always stays f32.
    """
    B, T, I = x.shape
    H, O, G, O_pad = prep["H"], prep["O"], prep["G"], prep["O_pad"]
    B_pad = _round_up(max(B, 8), 8)   # f32 sublane alignment + MXU row use

    # Layout plumbing stays in plain JAX: batch-first -> time-major, pad batch.
    x_tm = jnp.transpose(x, (1, 0, 2)).astype(jnp.float32)       # (T, B, I)
    if B_pad != B:
        x_tm = jnp.pad(x_tm, ((0, 0), (0, B_pad - B), (0, 0)))
    x2 = x_tm.reshape(T * B_pad, I)                              # rows (t, b)

    if hidden is None:
        h0 = jnp.zeros((B_pad, G), jnp.float32)
    else:
        if hidden.shape != (1, B, H):
            raise ValueError(
                f"hidden must have shape (1, {B}, {H}) for a single-layer GRU, "
                f"got {hidden.shape}")
        h0 = hidden.reshape(B, H).astype(jnp.float32)
        h0 = jnp.pad(h0, ((0, B_pad - B), (0, G - H)))           # padded lanes = 0

    vmem = pl.BlockSpec(memory_space=pltpu.MemorySpace.VMEM)
    kernel = functools.partial(_gru_fc_kernel, T=T, B_pad=B_pad, G=G,
                               bulk_dtype=bulk_matmul_dtype)

    q_pad, h_out = pl.pallas_call(
        kernel,
        out_shape=(
            jax.ShapeDtypeStruct((T * B_pad, O_pad), jnp.float32),
            jax.ShapeDtypeStruct((B_pad, G), jnp.float32),
        ),
        in_specs=[vmem] * 7,
        out_specs=(vmem, vmem),
        scratch_shapes=[
            pltpu.VMEM((T * B_pad, 3 * G), jnp.float32),   # fused gi (r|z|n)
            pltpu.VMEM((T * B_pad, G), jnp.float32),       # hseq
        ],
    )(x2, prep["wih_cat"], prep["whh_cat"], prep["biases"],
      prep["wfc"], prep["bfc"], h0)

    q = q_pad.reshape(T, B_pad, O_pad)[:, :B, :O]    # drop batch/lane padding
    q = jnp.transpose(q, (1, 0, 2))                  # (B, T, O)
    hidden_out = h_out[:B, :H].reshape(1, B, H)      # nn.GRU: (num_layers, B, H)
    return q, hidden_out


def init_params(key, input_dim, output_dim, hidden_dim=64):
    """Deterministic init mirroring PyTorch defaults: U(-1/sqrt(H), 1/sqrt(H))."""
    ks = jax.random.split(key, 6)
    bound = 1.0 / jnp.sqrt(hidden_dim)
    u = lambda k, shape: jax.random.uniform(k, shape, jnp.float32, -bound, bound)
    return {
        "w_ih": u(ks[0], (3 * hidden_dim, input_dim)),   # gate order r,z,n
        "w_hh": u(ks[1], (3 * hidden_dim, hidden_dim)),
        "b_ih": u(ks[2], (3 * hidden_dim,)),
        "b_hh": u(ks[3], (3 * hidden_dim,)),
        "w_fc": u(ks[4], (output_dim, hidden_dim)),
        "b_fc": u(ks[5], (output_dim,)),
    }


def _reference_forward(x, params, hidden=None):
    """Pure-JAX reference of the PyTorch GRU + Linear forward (for validation)."""
    B, T, I = x.shape
    H = params["w_hh"].shape[1]
    h = jnp.zeros((B, H), jnp.float32) if hidden is None else hidden.reshape(B, H)
    wih_t = params["w_ih"].T
    whh_t = params["w_hh"].T
    outs = []
    for t in range(T):
        gi = x[:, t, :] @ wih_t + params["b_ih"]
        gh = h @ whh_t + params["b_hh"]
        i_r, i_z, i_n = jnp.split(gi, 3, axis=1)
        h_r, h_z, h_n = jnp.split(gh, 3, axis=1)
        r = jax.nn.sigmoid(i_r + h_r)
        z = jax.nn.sigmoid(i_z + h_z)
        n = jnp.tanh(i_n + r * h_n)
        h = (1.0 - z) * n + z * h
        outs.append(h)
    out = jnp.stack(outs, axis=1)                       # (B, T, H)
    q = out @ params["w_fc"].T + params["b_fc"]         # (B, T, O)
    return q, h.reshape(1, B, H)


if __name__ == "__main__":
    # Small shapes consistent with the module's forward.
    batch, seq, input_dim, hidden_dim, output_dim = 2, 8, 4, 32, 6

    key = jax.random.PRNGKey(0)
    k_params, k_x = jax.random.split(key)
    params = init_params(k_params, input_dim, output_dim, hidden_dim)
    prep = prepare_params(params)
    x = jax.random.normal(k_x, (batch, seq, input_dim), dtype=jnp.float32)

    # Run 1: no initial hidden state.
    q, h = qnetwork_forward(x, prep, hidden=None)
    q = jax.block_until_ready(q)
    h = jax.block_until_ready(h)

    q_ref, h_ref = _reference_forward(x, params, hidden=None)
    assert q.shape == (batch, seq, output_dim)
    assert h.shape == (1, batch, hidden_dim)
    assert jnp.allclose(q, q_ref, atol=1e-5, rtol=1e-5)
    assert jnp.allclose(h, h_ref, atol=1e-5, rtol=1e-5)

    # Run 2: carry the hidden state (exercises the `hidden is not None` path).
    q2, h2 = qnetwork_forward(x, prep, hidden=h)
    q2 = jax.block_until_ready(q2)
    q2_ref, h2_ref = _reference_forward(x, params, hidden=h_ref)
    assert jnp.allclose(q2, q2_ref, atol=1e-5, rtol=1e-5)
    assert jnp.allclose(h2, h2_ref, atol=1e-5, rtol=1e-5)

    print("KERNEL_OK")
</pallas_src>

<mosaic_0001>
module attributes {stable_mosaic.version = 11 : i64} {
  func.func @_gru_fc_kernel(%arg0: memref<64x4xf32, #tpu.memory_space<vmem>>, %arg1: memref<4x384xf32, #tpu.memory_space<vmem>>, %arg2: memref<128x384xf32, #tpu.memory_space<vmem>>, %arg3: memref<2x384xf32, #tpu.memory_space<vmem>>, %arg4: memref<128x128xf32, #tpu.memory_space<vmem>>, %arg5: memref<1x128xf32, #tpu.memory_space<vmem>>, %arg6: memref<8x128xf32, #tpu.memory_space<vmem>>, %arg7: memref<64x128xf32, #tpu.memory_space<vmem>>, %arg8: memref<8x128xf32, #tpu.memory_space<vmem>>, %arg9: memref<64x384xf32, #tpu.memory_space<vmem>>, %arg10: memref<64x128xf32, #tpu.memory_space<vmem>>) attributes {dimension_semantics = [], scalar_prefetch = 0 : i64, scratch_operands = 2 : i64, tpu.core_type = #tpu.core_type<tc>} {
    %c0 = arith.constant 0 : index
    %c0_0 = arith.constant 0 : index
    %0 = vector.load %arg0[%c0, %c0_0] : memref<64x4xf32, #tpu.memory_space<vmem>>, vector<64x4xf32>
    %c0_1 = arith.constant 0 : index
    %c0_2 = arith.constant 0 : index
    %1 = vector.load %arg1[%c0_1, %c0_2] : memref<4x384xf32, #tpu.memory_space<vmem>>, vector<4x384xf32>
    %cst = arith.constant dense<0.000000e+00> : vector<64x384xf32>
    %2 = tpu.matmul %0, %1, %cst {dimension_numbers = #tpu.dot_dimension_numbers<[1], [0], [0], [1], [0, 0, 1, 1], [], []>} : vector<64x4xf32>, vector<4x384xf32>, vector<64x384xf32> -> vector<64x384xf32>
    %c0_3 = arith.constant 0 : index
    %c0_4 = arith.constant 0 : index
    %3 = vector.load %arg3[%c0_3, %c0_4] : memref<2x384xf32, #tpu.memory_space<vmem>>, vector<1x384xf32>
    %4 = vector.broadcast %3 : vector<1x384xf32> to vector<64x384xf32>
    %5 = arith.addf %2, %4 : vector<64x384xf32>
    %c0_5 = arith.constant 0 : index
    %c0_6 = arith.constant 0 : index
    %6 = vector.load %arg9[%c0_5, %c0_6] : memref<64x384xf32, #tpu.memory_space<vmem>>, vector<64x384xf32>
    tpu.vector_store %arg9[%c0_5, %c0_6], %5 {strides = array<i32>} : memref<64x384xf32, #tpu.memory_space<vmem>>, vector<64x384xf32>,
    %c1 = arith.constant 1 : index
    %c0_7 = arith.constant 0 : index
    %7 = vector.load %arg3[%c1, %c0_7] : memref<2x384xf32, #tpu.memory_space<vmem>>, vector<1x384xf32>
    %8 = vector.shape_cast %7 : vector<1x384xf32> to vector<1x384xf32>
    %9 = vector.broadcast %8 : vector<1x384xf32> to vector<8x384xf32>
    %c0_8 = arith.constant 0 : index
    %c0_9 = arith.constant 0 : index
    %10 = vector.load %arg6[%c0_8, %c0_9] : memref<8x128xf32, #tpu.memory_space<vmem>>, vector<8x128xf32>
    %c0_10 = arith.constant 0 : index
    %c0_11 = arith.constant 0 : index
    %11 = vector.load %arg9[%c0_10, %c0_11] : memref<64x384xf32, #tpu.memory_space<vmem>>, vector<8x384xf32>
    %c0_12 = arith.constant 0 : index
    %c0_13 = arith.constant 0 : index
    %12 = vector.load %arg2[%c0_12, %c0_13] : memref<128x384xf32, #tpu.memory_space<vmem>>, vector<128x384xf32>
    %cst_14 = arith.constant dense<0.000000e+00> : vector<8x384xf32>
    %13 = tpu.matmul %10, %12, %cst_14 {dimension_numbers = #tpu.dot_dimension_numbers<[1], [0], [0], [1], [0, 0, 1, 1], [], []>} : vector<8x128xf32>, vector<128x384xf32>, vector<8x384xf32> -> vector<8x384xf32>
    %14 = arith.addf %13, %9 : vector<8x384xf32>
    %15 = vector.extract_strided_slice %11 {offsets = [0, 0], sizes = [8, 256], strides = [1, 1]} : vector<8x384xf32> to vector<8x256xf32>
    %16 = vector.extract_strided_slice %14 {offsets = [0, 0], sizes = [8, 256], strides = [1, 1]} : vector<8x384xf32> to vector<8x256xf32>
    %17 = arith.addf %15, %16 : vector<8x256xf32>
    %18 = arith.negf %17 : vector<8x256xf32>
    %19 = math.exp %18 : vector<8x256xf32>
    %cst_15 = arith.constant 1.000000e+00 : f32
    %20 = vector.broadcast %cst_15 : f32 to vector<8x256xf32>
    %21 = arith.addf %20, %19 : vector<8x256xf32>
    %22 = arith.divf %20, %21 : vector<8x256xf32>
    %23 = vector.extract_strided_slice %22 {offsets = [0, 0], sizes = [8, 128], strides = [1, 1]} : vector<8x256xf32> to vector<8x128xf32>
    %24 = vector.extract_strided_slice %22 {offsets = [0, 128], sizes = [8, 128], strides = [1, 1]} : vector<8x256xf32> to vector<8x128xf32>
    %25 = vector.extract_strided_slice %11 {offsets = [0, 256], sizes = [8, 128], strides = [1, 1]} : vector<8x384xf32> to vector<8x128xf32>
    %26 = vector.extract_strided_slice %14 {offsets = [0, 256], sizes = [8, 128], strides = [1, 1]} : vector<8x384xf32> to vector<8x128xf32>
    %27 = arith.mulf %23, %26 : vector<8x128xf32>
    %28 = arith.addf %25, %27 : vector<8x128xf32>
    %29 = math.tanh %28 : vector<8x128xf32>
    %cst_16 = arith.constant 1.000000e+00 : f32
    %30 = vector.broadcast %cst_16 : f32 to vector<8x128xf32>
    %31 = arith.subf %30, %24 : vector<8x128xf32>
    %32 = arith.mulf %31, %29 : vector<8x128xf32>
    %33 = arith.mulf %24, %10 : vector<8x128xf32>
    %34 = arith.addf %32, %33 : vector<8x128xf32>
    %c0_17 = arith.constant 0 : index
    %c0_18 = arith.constant 0 : index
    %35 = vector.load %arg10[%c0_17, %c0_18] : memref<64x128xf32, #tpu.memory_space<vmem>>, vector<8x128xf32>
    tpu.vector_store %arg10[%c0_17, %c0_18], %34 {strides = array<i32>} : memref<64x128xf32, #tpu.memory_space<vmem>>, vector<8x128xf32>,
    %c8 = arith.constant 8 : index
    %c0_19 = arith.constant 0 : index
    %36 = vector.load %arg9[%c8, %c0_19] : memref<64x384xf32, #tpu.memory_space<vmem>>, vector<8x384xf32>
    %c0_20 = arith.constant 0 : index
    %c0_21 = arith.constant 0 : index
    %37 = vector.load %arg2[%c0_20, %c0_21] : memref<128x384xf32, #tpu.memory_space<vmem>>, vector<128x384xf32>
    %cst_22 = arith.constant dense<0.000000e+00> : vector<8x384xf32>
    %38 = tpu.matmul %34, %37, %cst_22 {dimension_numbers = #tpu.dot_dimension_numbers<[1], [0], [0], [1], [0, 0, 1, 1], [], []>} : vector<8x128xf32>, vector<128x384xf32>, vector<8x384xf32> -> vector<8x384xf32>
    %39 = arith.addf %38, %9 : vector<8x384xf32>
    %40 = vector.extract_strided_slice %36 {offsets = [0, 0], sizes = [8, 256], strides = [1, 1]} : vector<8x384xf32> to vector<8x256xf32>
    %41 = vector.extract_strided_slice %39 {offsets = [0, 0], sizes = [8, 256], strides = [1, 1]} : vector<8x384xf32> to vector<8x256xf32>
    %42 = arith.addf %40, %41 : vector<8x256xf32>
    %43 = arith.negf %42 : vector<8x256xf32>
    %44 = math.exp %43 : vector<8x256xf32>
    %cst_23 = arith.constant 1.000000e+00 : f32
    %45 = vector.broadcast %cst_23 : f32 to vector<8x256xf32>
    %46 = arith.addf %45, %44 : vector<8x256xf32>
    %47 = arith.divf %45, %46 : vector<8x256xf32>
    %48 = vector.extract_strided_slice %47 {offsets = [0, 0], sizes = [8, 128], strides = [1, 1]} : vector<8x256xf32> to vector<8x128xf32>
    %49 = vector.extract_strided_slice %47 {offsets = [0, 128], sizes = [8, 128], strides = [1, 1]} : vector<8x256xf32> to vector<8x128xf32>
    %50 = vector.extract_strided_slice %36 {offsets = [0, 256], sizes = [8, 128], strides = [1, 1]} : vector<8x384xf32> to vector<8x128xf32>
    %51 = vector.extract_strided_slice %39 {offsets = [0, 256], sizes = [8, 128], strides = [1, 1]} : vector<8x384xf32> to vector<8x128xf32>
    %52 = arith.mulf %48, %51 : vector<8x128xf32>
    %53 = arith.addf %50, %52 : vector<8x128xf32>
    %54 = math.tanh %53 : vector<8x128xf32>
    %cst_24 = arith.constant 1.000000e+00 : f32
    %55 = vector.broadcast %cst_24 : f32 to vector<8x128xf32>
    %56 = arith.subf %55, %49 : vector<8x128xf32>
    %57 = arith.mulf %56, %54 : vector<8x128xf32>
    %58 = arith.mulf %49, %34 : vector<8x128xf32>
    %59 = arith.addf %57, %58 : vector<8x128xf32>
    %c8_25 = arith.constant 8 : index
    %c0_26 = arith.constant 0 : index
    %60 = vector.load %arg10[%c8_25, %c0_26] : memref<64x128xf32, #tpu.memory_space<vmem>>, vector<8x128xf32>
    tpu.vector_store %arg10[%c8_25, %c0_26], %59 {strides = array<i32>} : memref<64x128xf32, #tpu.memory_space<vmem>>, vector<8x128xf32>,
    %c16 = arith.constant 16 : index
    %c0_27 = arith.constant 0 : index
    %61 = vector.load %arg9[%c16, %c0_27] : memref<64x384xf32, #tpu.memory_space<vmem>>, vector<8x384xf32>
    %c0_28 = arith.constant 0 : index
    %c0_29 = arith.constant 0 : index
    %62 = vector.load %arg2[%c0_28, %c0_29] : memref<128x384xf32, #tpu.memory_space<vmem>>, vector<128x384xf32>
    %cst_30 = arith.constant dense<0.000000e+00> : vector<8x384xf32>
    %63 = tpu.matmul %59, %62, %cst_30 {dimension_numbers = #tpu.dot_dimension_numbers<[1], [0], [0], [1], [0, 0, 1, 1], [], []>} : vector<8x128xf32>, vector<128x384xf32>, vector<8x384xf32> -> vector<8x384xf32>
    %64 = arith.addf %63, %9 : vector<8x384xf32>
    %65 = vector.extract_strided_slice %61 {offsets = [0, 0], sizes = [8, 256], strides = [1, 1]} : vector<8x384xf32> to vector<8x256xf32>
    %66 = vector.extract_strided_slice %64 {offsets = [0, 0], sizes = [8, 256], strides = [1, 1]} : vector<8x384xf32> to vector<8x256xf32>
    %67 = arith.addf %65, %66 : vector<8x256xf32>
    %68 = arith.negf %67 : vector<8x256xf32>
    %69 = math.exp %68 : vector<8x256xf32>
    %cst_31 = arith.constant 1.000000e+00 : f32
    %70 = vector.broadcast %cst_31 : f32 to vector<8x256xf32>
    %71 = arith.addf %70, %69 : vector<8x256xf32>
    %72 = arith.divf %70, %71 : vector<8x256xf32>
    %73 = vector.extract_strided_slice %72 {offsets = [0, 0], sizes = [8, 128], strides = [1, 1]} : vector<8x256xf32> to vector<8x128xf32>
    %74 = vector.extract_strided_slice %72 {offsets = [0, 128], sizes = [8, 128], strides = [1, 1]} : vector<8x256xf32> to vector<8x128xf32>
    %75 = vector.extract_strided_slice %61 {offsets = [0, 256], sizes = [8, 128], strides = [1, 1]} : vector<8x384xf32> to vector<8x128xf32>
    %76 = vector.extract_strided_slice %64 {offsets = [0, 256], sizes = [8, 128], strides = [1, 1]} : vector<8x384xf32> to vector<8x128xf32>
    %77 = arith.mulf %73, %76 : vector<8x128xf32>
    %78 = arith.addf %75, %77 : vector<8x128xf32>
    %79 = math.tanh %78 : vector<8x128xf32>
    %cst_32 = arith.constant 1.000000e+00 : f32
    %80 = vector.broadcast %cst_32 : f32 to vector<8x128xf32>
    %81 = arith.subf %80, %74 : vector<8x128xf32>
    %82 = arith.mulf %81, %79 : vector<8x128xf32>
    %83 = arith.mulf %74, %59 : vector<8x128xf32>
    %84 = arith.addf %82, %83 : vector<8x128xf32>
    %c16_33 = arith.constant 16 : index
    %c0_34 = arith.constant 0 : index
    %85 = vector.load %arg10[%c16_33, %c0_34] : memref<64x128xf32, #tpu.memory_space<vmem>>, vector<8x128xf32>
    tpu.vector_store %arg10[%c16_33, %c0_34], %84 {strides = array<i32>} : memref<64x128xf32, #tpu.memory_space<vmem>>, vector<8x128xf32>,
    %c24 = arith.constant 24 : index
    %c0_35 = arith.constant 0 : index
    %86 = vector.load %arg9[%c24, %c0_35] : memref<64x384xf32, #tpu.memory_space<vmem>>, vector<8x384xf32>
    %c0_36 = arith.constant 0 : index
    %c0_37 = arith.constant 0 : index
    %87 = vector.load %arg2[%c0_36, %c0_37] : memref<128x384xf32, #tpu.memory_space<vmem>>, vector<128x384xf32>
    %cst_38 = arith.constant dense<0.000000e+00> : vector<8x384xf32>
    %88 = tpu.matmul %84, %87, %cst_38 {dimension_numbers = #tpu.dot_dimension_numbers<[1], [0], [0], [1], [0, 0, 1, 1], [], []>} : vector<8x128xf32>, vector<128x384xf32>, vector<8x384xf32> -> vector<8x384xf32>
    %89 = arith.addf %88, %9 : vector<8x384xf32>
    %90 = vector.extract_strided_slice %86 {offsets = [0, 0], sizes = [8, 256], strides = [1, 1]} : vector<8x384xf32> to vector<8x256xf32>
    %91 = vector.extract_strided_slice %89 {offsets = [0, 0], sizes = [8, 256], strides = [1, 1]} : vector<8x384xf32> to vector<8x256xf32>
    %92 = arith.addf %90, %91 : vector<8x256xf32>
    %93 = arith.negf %92 : vector<8x256xf32>
    %94 = math.exp %93 : vector<8x256xf32>
    %cst_39 = arith.constant 1.000000e+00 : f32
    %95 = vector.broadcast %cst_39 : f32 to vector<8x256xf32>
    %96 = arith.addf %95, %94 : vector<8x256xf32>
    %97 = arith.divf %95, %96 : vector<8x256xf32>
    %98 = vector.extract_strided_slice %97 {offsets = [0, 0], sizes = [8, 128], strides = [1, 1]} : vector<8x256xf32> to vector<8x128xf32>
    %99 = vector.extract_strided_slice %97 {offsets = [0, 128], sizes = [8, 128], strides = [1, 1]} : vector<8x256xf32> to vector<8x128xf32>
    %100 = vector.extract_strided_slice %86 {offsets = [0, 256], sizes = [8, 128], strides = [1, 1]} : vector<8x384xf32> to vector<8x128xf32>
    %101 = vector.extract_strided_slice %89 {offsets = [0, 256], sizes = [8, 128], strides = [1, 1]} : vector<8x384xf32> to vector<8x128xf32>
    %102 = arith.mulf %98, %101 : vector<8x128xf32>
    %103 = arith.addf %100, %102 : vector<8x128xf32>
    %104 = math.tanh %103 : vector<8x128xf32>
    %cst_40 = arith.constant 1.000000e+00 : f32
    %105 = vector.broadcast %cst_40 : f32 to vector<8x128xf32>
    %106 = arith.subf %105, %99 : vector<8x128xf32>
    %107 = arith.mulf %106, %104 : vector<8x128xf32>
    %108 = arith.mulf %99, %84 : vector<8x128xf32>
    %109 = arith.addf %107, %108 : vector<8x128xf32>
    %c24_41 = arith.constant 24 : index
    %c0_42 = arith.constant 0 : index
    %110 = vector.load %arg10[%c24_41, %c0_42] : memref<64x128xf32, #tpu.memory_space<vmem>>, vector<8x128xf32>
    tpu.vector_store %arg10[%c24_41, %c0_42], %109 {strides = array<i32>} : memref<64x128xf32, #tpu.memory_space<vmem>>, vector<8x128xf32>,
    %c32 = arith.constant 32 : index
    %c0_43 = arith.constant 0 : index
    %111 = vector.load %arg9[%c32, %c0_43] : memref<64x384xf32, #tpu.memory_space<vmem>>, vector<8x384xf32>
    %c0_44 = arith.constant 0 : index
    %c0_45 = arith.constant 0 : index
    %112 = vector.load %arg2[%c0_44, %c0_45] : memref<128x384xf32, #tpu.memory_space<vmem>>, vector<128x384xf32>
    %cst_46 = arith.constant dense<0.000000e+00> : vector<8x384xf32>
    %113 = tpu.matmul %109, %112, %cst_46 {dimension_numbers = #tpu.dot_dimension_numbers<[1], [0], [0], [1], [0, 0, 1, 1], [], []>} : vector<8x128xf32>, vector<128x384xf32>, vector<8x384xf32> -> vector<8x384xf32>
    %114 = arith.addf %113, %9 : vector<8x384xf32>
    %115 = vector.extract_strided_slice %111 {offsets = [0, 0], sizes = [8, 256], strides = [1, 1]} : vector<8x384xf32> to vector<8x256xf32>
    %116 = vector.extract_strided_slice %114 {offsets = [0, 0], sizes = [8, 256], strides = [1, 1]} : vector<8x384xf32> to vector<8x256xf32>
    %117 = arith.addf %115, %116 : vector<8x256xf32>
    %118 = arith.negf %117 : vector<8x256xf32>
    %119 = math.exp %118 : vector<8x256xf32>
    %cst_47 = arith.constant 1.000000e+00 : f32
    %120 = vector.broadcast %cst_47 : f32 to vector<8x256xf32>
    %121 = arith.addf %120, %119 : vector<8x256xf32>
    %122 = arith.divf %120, %121 : vector<8x256xf32>
    %123 = vector.extract_strided_slice %122 {offsets = [0, 0], sizes = [8, 128], strides = [1, 1]} : vector<8x256xf32> to vector<8x128xf32>
    %124 = vector.extract_strided_slice %122 {offsets = [0, 128], sizes = [8, 128], strides = [1, 1]} : vector<8x256xf32> to vector<8x128xf32>
    %125 = vector.extract_strided_slice %111 {offsets = [0, 256], sizes = [8, 128], strides = [1, 1]} : vector<8x384xf32> to vector<8x128xf32>
    %126 = vector.extract_strided_slice %114 {offsets = [0, 256], sizes = [8, 128], strides = [1, 1]} : vector<8x384xf32> to vector<8x128xf32>
    %127 = arith.mulf %123, %126 : vector<8x128xf32>
    %128 = arith.addf %125, %127 : vector<8x128xf32>
    %129 = math.tanh %128 : vector<8x128xf32>
    %cst_48 = arith.constant 1.000000e+00 : f32
    %130 = vector.broadcast %cst_48 : f32 to vector<8x128xf32>
    %131 = arith.subf %130, %124 : vector<8x128xf32>
    %132 = arith.mulf %131, %129 : vector<8x128xf32>
    %133 = arith.mulf %124, %109 : vector<8x128xf32>
    %134 = arith.addf %132, %133 : vector<8x128xf32>
    %c32_49 = arith.constant 32 : index
    %c0_50 = arith.constant 0 : index
    %135 = vector.load %arg10[%c32_49, %c0_50] : memref<64x128xf32, #tpu.memory_space<vmem>>, vector<8x128xf32>
    tpu.vector_store %arg10[%c32_49, %c0_50], %134 {strides = array<i32>} : memref<64x128xf32, #tpu.memory_space<vmem>>, vector<8x128xf32>,
    %c40 = arith.constant 40 : index
    %c0_51 = arith.constant 0 : index
    %136 = vector.load %arg9[%c40, %c0_51] : memref<64x384xf32, #tpu.memory_space<vmem>>, vector<8x384xf32>
    %c0_52 = arith.constant 0 : index
    %c0_53 = arith.constant 0 : index
    %137 = vector.load %arg2[%c0_52, %c0_53] : memref<128x384xf32, #tpu.memory_space<vmem>>, vector<128x384xf32>
    %cst_54 = arith.constant dense<0.000000e+00> : vector<8x384xf32>
    %138 = tpu.matmul %134, %137, %cst_54 {dimension_numbers = #tpu.dot_dimension_numbers<[1], [0], [0], [1], [0, 0, 1, 1], [], []>} : vector<8x128xf32>, vector<128x384xf32>, vector<8x384xf32> -> vector<8x384xf32>
    %139 = arith.addf %138, %9 : vector<8x384xf32>
    %140 = vector.extract_strided_slice %136 {offsets = [0, 0], sizes = [8, 256], strides = [1, 1]} : vector<8x384xf32> to vector<8x256xf32>
    %141 = vector.extract_strided_slice %139 {offsets = [0, 0], sizes = [8, 256], strides = [1, 1]} : vector<8x384xf32> to vector<8x256xf32>
    %142 = arith.addf %140, %141 : vector<8x256xf32>
    %143 = arith.negf %142 : vector<8x256xf32>
    %144 = math.exp %143 : vector<8x256xf32>
    %cst_55 = arith.constant 1.000000e+00 : f32
    %145 = vector.broadcast %cst_55 : f32 to vector<8x256xf32>
    %146 = arith.addf %145, %144 : vector<8x256xf32>
    %147 = arith.divf %145, %146 : vector<8x256xf32>
    %148 = vector.extract_strided_slice %147 {offsets = [0, 0], sizes = [8, 128], strides = [1, 1]} : vector<8x256xf32> to vector<8x128xf32>
    %149 = vector.extract_strided_slice %147 {offsets = [0, 128], sizes = [8, 128], strides = [1, 1]} : vector<8x256xf32> to vector<8x128xf32>
    %150 = vector.extract_strided_slice %136 {offsets = [0, 256], sizes = [8, 128], strides = [1, 1]} : vector<8x384xf32> to vector<8x128xf32>
    %151 = vector.extract_strided_slice %139 {offsets = [0, 256], sizes = [8, 128], strides = [1, 1]} : vector<8x384xf32> to vector<8x128xf32>
    %152 = arith.mulf %148, %151 : vector<8x128xf32>
    %153 = arith.addf %150, %152 : vector<8x128xf32>
    %154 = math.tanh %153 : vector<8x128xf32>
    %cst_56 = arith.constant 1.000000e+00 : f32
    %155 = vector.broadcast %cst_56 : f32 to vector<8x128xf32>
    %156 = arith.subf %155, %149 : vector<8x128xf32>
    %157 = arith.mulf %156, %154 : vector<8x128xf32>
    %158 = arith.mulf %149, %134 : vector<8x128xf32>
    %159 = arith.addf %157, %158 : vector<8x128xf32>
    %c40_57 = arith.constant 40 : index
    %c0_58 = arith.constant 0 : index
    %160 = vector.load %arg10[%c40_57, %c0_58] : memref<64x128xf32, #tpu.memory_space<vmem>>, vector<8x128xf32>
    tpu.vector_store %arg10[%c40_57, %c0_58], %159 {strides = array<i32>} : memref<64x128xf32, #tpu.memory_space<vmem>>, vector<8x128xf32>,
    %c48 = arith.constant 48 : index
    %c0_59 = arith.constant 0 : index
    %161 = vector.load %arg9[%c48, %c0_59] : memref<64x384xf32, #tpu.memory_space<vmem>>, vector<8x384xf32>
    %c0_60 = arith.constant 0 : index
    %c0_61 = arith.constant 0 : index
    %162 = vector.load %arg2[%c0_60, %c0_61] : memref<128x384xf32, #tpu.memory_space<vmem>>, vector<128x384xf32>
    %cst_62 = arith.constant dense<0.000000e+00> : vector<8x384xf32>
    %163 = tpu.matmul %159, %162, %cst_62 {dimension_numbers = #tpu.dot_dimension_numbers<[1], [0], [0], [1], [0, 0, 1, 1], [], []>} : vector<8x128xf32>, vector<128x384xf32>, vector<8x384xf32> -> vector<8x384xf32>
    %164 = arith.addf %163, %9 : vector<8x384xf32>
    %165 = vector.extract_strided_slice %161 {offsets = [0, 0], sizes = [8, 256], strides = [1, 1]} : vector<8x384xf32> to vector<8x256xf32>
    %166 = vector.extract_strided_slice %164 {offsets = [0, 0], sizes = [8, 256], strides = [1, 1]} : vector<8x384xf32> to vector<8x256xf32>
    %167 = arith.addf %165, %166 : vector<8x256xf32>
    %168 = arith.negf %167 : vector<8x256xf32>
    %169 = math.exp %168 : vector<8x256xf32>
    %cst_63 = arith.constant 1.000000e+00 : f32
    %170 = vector.broadcast %cst_63 : f32 to vector<8x256xf32>
    %171 = arith.addf %170, %169 : vector<8x256xf32>
    %172 = arith.divf %170, %171 : vector<8x256xf32>
    %173 = vector.extract_strided_slice %172 {offsets = [0, 0], sizes = [8, 128], strides = [1, 1]} : vector<8x256xf32> to vector<8x128xf32>
    %174 = vector.extract_strided_slice %172 {offsets = [0, 128], sizes = [8, 128], strides = [1, 1]} : vector<8x256xf32> to vector<8x128xf32>
    %175 = vector.extract_strided_slice %161 {offsets = [0, 256], sizes = [8, 128], strides = [1, 1]} : vector<8x384xf32> to vector<8x128xf32>
    %176 = vector.extract_strided_slice %164 {offsets = [0, 256], sizes = [8, 128], strides = [1, 1]} : vector<8x384xf32> to vector<8x128xf32>
    %177 = arith.mulf %173, %176 : vector<8x128xf32>
    %178 = arith.addf %175, %177 : vector<8x128xf32>
    %179 = math.tanh %178 : vector<8x128xf32>
    %cst_64 = arith.constant 1.000000e+00 : f32
    %180 = vector.broadcast %cst_64 : f32 to vector<8x128xf32>
    %181 = arith.subf %180, %174 : vector<8x128xf32>
    %182 = arith.mulf %181, %179 : vector<8x128xf32>
    %183 = arith.mulf %174, %159 : vector<8x128xf32>
    %184 = arith.addf %182, %183 : vector<8x128xf32>
    %c48_65 = arith.constant 48 : index
    %c0_66 = arith.constant 0 : index
    %185 = vector.load %arg10[%c48_65, %c0_66] : memref<64x128xf32, #tpu.memory_space<vmem>>, vector<8x128xf32>
    tpu.vector_store %arg10[%c48_65, %c0_66], %184 {strides = array<i32>} : memref<64x128xf32, #tpu.memory_space<vmem>>, vector<8x128xf32>,
    %c56 = arith.constant 56 : index
    %c0_67 = arith.constant 0 : index
    %186 = vector.load %arg9[%c56, %c0_67] : memref<64x384xf32, #tpu.memory_space<vmem>>, vector<8x384xf32>
    %c0_68 = arith.constant 0 : index
    %c0_69 = arith.constant 0 : index
    %187 = vector.load %arg2[%c0_68, %c0_69] : memref<128x384xf32, #tpu.memory_space<vmem>>, vector<128x384xf32>
    %cst_70 = arith.constant dense<0.000000e+00> : vector<8x384xf32>
    %188 = tpu.matmul %184, %187, %cst_70 {dimension_numbers = #tpu.dot_dimension_numbers<[1], [0], [0], [1], [0, 0, 1, 1], [], []>} : vector<8x128xf32>, vector<128x384xf32>, vector<8x384xf32> -> vector<8x384xf32>
    %189 = arith.addf %188, %9 : vector<8x384xf32>
    %190 = vector.extract_strided_slice %186 {offsets = [0, 0], sizes = [8, 256], strides = [1, 1]} : vector<8x384xf32> to vector<8x256xf32>
    %191 = vector.extract_strided_slice %189 {offsets = [0, 0], sizes = [8, 256], strides = [1, 1]} : vector<8x384xf32> to vector<8x256xf32>
    %192 = arith.addf %190, %191 : vector<8x256xf32>
    %193 = arith.negf %192 : vector<8x256xf32>
    %194 = math.exp %193 : vector<8x256xf32>
    %cst_71 = arith.constant 1.000000e+00 : f32
    %195 = vector.broadcast %cst_71 : f32 to vector<8x256xf32>
    %196 = arith.addf %195, %194 : vector<8x256xf32>
    %197 = arith.divf %195, %196 : vector<8x256xf32>
    %198 = vector.extract_strided_slice %197 {offsets = [0, 0], sizes = [8, 128], strides = [1, 1]} : vector<8x256xf32> to vector<8x128xf32>
    %199 = vector.extract_strided_slice %197 {offsets = [0, 128], sizes = [8, 128], strides = [1, 1]} : vector<8x256xf32> to vector<8x128xf32>
    %200 = vector.extract_strided_slice %186 {offsets = [0, 256], sizes = [8, 128], strides = [1, 1]} : vector<8x384xf32> to vector<8x128xf32>
    %201 = vector.extract_strided_slice %189 {offsets = [0, 256], sizes = [8, 128], strides = [1, 1]} : vector<8x384xf32> to vector<8x128xf32>
    %202 = arith.mulf %198, %201 : vector<8x128xf32>
    %203 = arith.addf %200, %202 : vector<8x128xf32>
    %204 = math.tanh %203 : vector<8x128xf32>
    %cst_72 = arith.constant 1.000000e+00 : f32
    %205 = vector.broadcast %cst_72 : f32 to vector<8x128xf32>
    %206 = arith.subf %205, %199 : vector<8x128xf32>
    %207 = arith.mulf %206, %204 : vector<8x128xf32>
    %208 = arith.mulf %199, %184 : vector<8x128xf32>
    %209 = arith.addf %207, %208 : vector<8x128xf32>
    %c56_73 = arith.constant 56 : index
    %c0_74 = arith.constant 0 : index
    %210 = vector.load %arg10[%c56_73, %c0_74] : memref<64x128xf32, #tpu.memory_space<vmem>>, vector<8x128xf32>
    tpu.vector_store %arg10[%c56_73, %c0_74], %209 {strides = array<i32>} : memref<64x128xf32, #tpu.memory_space<vmem>>, vector<8x128xf32>,
    %c0_75 = arith.constant 0 : index
    %c0_76 = arith.constant 0 : index
    %211 = vector.load %arg8[%c0_75, %c0_76] : memref<8x128xf32, #tpu.memory_space<vmem>>, vector<8x128xf32>
    tpu.vector_store %arg8[%c0_75, %c0_76], %209 {strides = array<i32>} : memref<8x128xf32, #tpu.memory_space<vmem>>, vector<8x128xf32>,
    %c0_77 = arith.constant 0 : index
    %c0_78 = arith.constant 0 : index
    %212 = vector.load %arg10[%c0_77, %c0_78] : memref<64x128xf32, #tpu.memory_space<vmem>>, vector<64x128xf32>
    %c0_79 = arith.constant 0 : index
    %c0_80 = arith.constant 0 : index
    %213 = vector.load %arg4[%c0_79, %c0_80] : memref<128x128xf32, #tpu.memory_space<vmem>>, vector<128x128xf32>
    %cst_81 = arith.constant dense<0.000000e+00> : vector<64x128xf32>
    %214 = tpu.matmul %212, %213, %cst_81 {dimension_numbers = #tpu.dot_dimension_numbers<[1], [0], [0], [1], [0, 0, 1, 1], [], []>} : vector<64x128xf32>, vector<128x128xf32>, vector<64x128xf32> -> vector<64x128xf32>
    %c0_82 = arith.constant 0 : index
    %c0_83 = arith.constant 0 : index
    %215 = vector.load %arg5[%c0_82, %c0_83] : memref<1x128xf32, #tpu.memory_space<vmem>>, vector<1x128xf32>
    %216 = vector.broadcast %215 : vector<1x128xf32> to vector<64x128xf32>
    %217 = arith.addf %214, %216 : vector<64x128xf32>
    %c0_84 = arith.constant 0 : index
    %c0_85 = arith.constant 0 : index
    %218 = vector.load %arg7[%c0_84, %c0_85] : memref<64x128xf32, #tpu.memory_space<vmem>>, vector<64x128xf32>
    tpu.vector_store %arg7[%c0_84, %c0_85], %217 {strides = array<i32>} : memref<64x128xf32, #tpu.memory_space<vmem>>, vector<64x128xf32>,
    return
  }
}

</mosaic_0001>

<llo_original>
// kernel: tpu_custom_call.1
$region0: #{tpu_custom_call.1}
  #allocation0 [shape = 'u32[]', space=smem, size = 0x4, offset = 0x4, fixed_abs, tag = 'smem constant byte address 0x4 - core index']
  #allocation1 [shape = 'u32[72,128]{1,0:T(1,128)}', space=vmem, size = 0x9000, scoped, tag = 'internal scratch']
  #allocation2 [shape = 'f32[64,384]{1,0:T(8,128)}', space=vmem, size = 0x18000, scoped, tag = 'scratch operand']
  #allocation3 [shape = 'f32[64,128]{1,0:T(8,128)}', space=vmem, size = 0x8000, scoped, tag = 'scratch operand']
  %s0 = inlined_call_operand.vmem [shape: f32[64,4], index: 0, kind: input, shape index: {}]
  %s1 = inlined_call_operand.vmem [shape: f32[4,384], index: 1, kind: input, shape index: {}]
  %s2 = inlined_call_operand.hbm [shape: f32[128,384], index: 2, kind: input, shape index: {}]
  %s3 = inlined_call_operand.vmem [shape: f32[2,384], index: 3, kind: input, shape index: {}]
  %s4 = inlined_call_operand.hbm [shape: f32[128,128], index: 4, kind: input, shape index: {}]
  %s5 = inlined_call_operand.vmem [shape: f32[1,128], index: 5, kind: input, shape index: {}]
  %s6 = inlined_call_operand.vmem [shape: f32[8,128], index: 6, kind: input, shape index: {}]
  %s7 = inlined_call_operand.hbm [shape: f32[64,128], index: 7, kind: output, shape index: {0}]
  %s8 = inlined_call_operand.hbm [shape: f32[8,128], index: 8, kind: output, shape index: {1}]
  %9 = xla_tuple %s7, %s8
  %s10 = sld [smem:[#allocation0]]
  $region54: #{tpu_custom_call.1} parent=0
    _
  %s12 = ssub.s32 1, %s10
  %s13 = scalar_select 0, %s12, %s10
  $region1: #{tpu_custom_call.1} parent=0
    #allocation4 [shape = 'u8[196608]{0}', space=vmem, size = 0x30000, scoped, tag = 'input window, operand 2, single buffered']
    #allocation5 [shape = 's32[1]{0}', space=sflag, size = 0x4, scoped, tag = 'scoped memory for tpu_custom_call.1']
    #allocation6 [shape = 's32[1]{0}', space=sflag, size = 0x4, scoped, tag = 'scoped memory for tpu_custom_call.1']
    #allocation7 [shape = 'u8[65536]{0}', space=vmem, size = 0x10000, scoped, tag = 'input window, operand 4, single buffered']
    #allocation8 [shape = 's32[1]{0}', space=sflag, size = 0x4, scoped, tag = 'scoped memory for tpu_custom_call.1']
    #allocation9 [shape = 'u8[32768]{0}', space=vmem, size = 0x8000, scoped, tag = 'output window, operand 0, single buffered']
    #allocation10 [shape = 'u8[4096]{0}', space=vmem, size = 0x1000, scoped, tag = 'output window, operand 1, single buffered']
    #allocation11 [shape = 's32[1]{0}', space=sflag, size = 0x4, scoped, tag = 'scoped memory for tpu_custom_call.1']
    %14 = vsyncpa [#allocation5], 0
    %15 = vsyncpa [#allocation8], 0
    %16 = vsyncpa [#allocation6], 0
    %17 = vsyncpa [#allocation11], 0
    // Predicated region
    $region2: #{tpu_custom_call.1} parent=1 // pred_check
      _
    $region3: #{tpu_custom_call.1} parent=1 // pred_check_branch
      %19 = sbr.rel (0) target = $region5
    $region4: #{tpu_custom_call.1} parent=1 // pred_region
      _
    $region5: #{tpu_custom_call.1} parent=1 // pred_fallthru
      _
    // Predicated region
    $region6: #{tpu_custom_call.1} parent=1 // pred_check
      _
    $region7: #{tpu_custom_call.1} parent=1 // pred_check_branch
      %21 = sbr.rel (0) target = $region9
    $region8: #{tpu_custom_call.1} parent=1 // pred_region
      _
    $region9: #{tpu_custom_call.1} parent=1 // pred_fallthru
      _
    // Predicated region
    $region10: #{tpu_custom_call.1} parent=1 // pred_check
      _
    $region11: #{tpu_custom_call.1} parent=1 // pred_check_branch
      %23 = sbr.rel (0) target = $region13
    $region12: #{tpu_custom_call.1} parent=1 // pred_region
      %25 = vsyncadd [#allocation5], 0
      %s26 = sshll.u32 %s2, 4
      %s27 = int_to_ptr.hbm [resolvable:$true] %s26
      %s28 = sshll.u32 [#allocation4], 4
      %s29 = int_to_ptr.vmem [resolvable:$true] %s28
      %34 = dma.hbm_to_vmem [thread:$0]  %s27, 6144, %s29, [#allocation5], 384, 384, 24
    $region13: #{tpu_custom_call.1} parent=1 // pred_fallthru
      _
    // Predicated region
    $region14: #{tpu_custom_call.1} parent=1 // pred_check
      _
    $region15: #{tpu_custom_call.1} parent=1 // pred_check_branch
      %36 = sbr.rel (0) target = $region17
    $region16: #{tpu_custom_call.1} parent=1 // pred_region
      _
    $region17: #{tpu_custom_call.1} parent=1 // pred_fallthru
      _
    // Predicated region
    $region18: #{tpu_custom_call.1} parent=1 // pred_check
      _
    $region19: #{tpu_custom_call.1} parent=1 // pred_check_branch
      %38 = sbr.rel (0) target = $region21
    $region20: #{tpu_custom_call.1} parent=1 // pred_region
      %40 = vsyncadd [#allocation8], 0
      %s41 = sshll.u32 %s4, 4
      %s42 = int_to_ptr.hbm [resolvable:$true] %s41
      %s43 = sshll.u32 [#allocation7], 4
      %s44 = int_to_ptr.vmem [resolvable:$true] %s43
      %49 = dma.hbm_to_vmem [thread:$0]  %s42, 2048, %s44, [#allocation8], 128, 128, 8
    $region21: #{tpu_custom_call.1} parent=1 // pred_fallthru
      _
    // Predicated region
    $region22: #{tpu_custom_call.1} parent=1 // pred_check
      _
    $region23: #{tpu_custom_call.1} parent=1 // pred_check_branch
      %51 = sbr.rel (0) target = $region25
    $region24: #{tpu_custom_call.1} parent=1 // pred_region
      _
    $region25: #{tpu_custom_call.1} parent=1 // pred_fallthru
      _
    // Predicated region
    $region26: #{tpu_custom_call.1} parent=1 // pred_check
      _
    $region27: #{tpu_custom_call.1} parent=1 // pred_check_branch
      %53 = sbr.rel (0) target = $region29
    $region28: #{tpu_custom_call.1} parent=1 // pred_region
      _
    $region29: #{tpu_custom_call.1} parent=1 // pred_fallthru
      _
    // Predicated region
    $region30: #{tpu_custom_call.1} parent=1 // pred_check
      _
    $region31: #{tpu_custom_call.1} parent=1 // pred_check_branch
      %55 = sbr.rel (0) target = $region33
    $region32: #{tpu_custom_call.1} parent=1 // pred_region
      %57 = dma.done [#allocation5], 6144
    $region33: #{tpu_custom_call.1} parent=1 // pred_fallthru
      _
    // Predicated region
    $region34: #{tpu_custom_call.1} parent=1 // pred_check
      _
    $region35: #{tpu_custom_call.1} parent=1 // pred_check_branch
      %59 = sbr.rel (0) target = $region37
    $region36: #{tpu_custom_call.1} parent=1 // pred_region
      %61 = dma.done [#allocation8], 2048
    $region37: #{tpu_custom_call.1} parent=1 // pred_fallthru
      _
    %v62 = vld [vmem:[%s0] sm:$0xff]
    %v63 = vld [vmem:[%s0 + $0x8] sm:$0xff]
    %v64 = vld [vmem:[%s0 + $0x10] sm:$0xff]
    %v65 = vld [vmem:[%s0 + $0x18] sm:$0xff]
    %v66 = vld [vmem:[%s0 + $0x20] sm:$0xff]
    %v67 = vld [vmem:[%s0 + $0x28] sm:$0xff]
    %v68 = vld [vmem:[%s0 + $0x30] sm:$0xff]
    %v69 = vld [vmem:[%s0 + $0x38] sm:$0xff]
    %v70 = vld [vmem:[%s1] sm:$0xff]
    %v71 = vld [vmem:[%s1 + $0x8] sm:$0xf]
    %v72 = vld [vmem:[%s3] ss:$2 sm:$0x7]
    %v74 = vperm.slane %v72, 0
    %v75 = vperm.slane %v72, 1
    %v76 = vperm.slane %v72, 2
    %82 = vst [vmem:[#allocation1] ss:$2 sm:$0xff] %v70
    %s83 = scalar_lea.vmem [#allocation1], 16
    %84 = vst [vmem:[%s83] ss:$2 sm:$0xff] %v71
    %v85 = vld.sshfl [vmem:[#allocation1] sm:$0xff pattern:$0x75316420]
    %v86 = vld.sshfl [vmem:[#allocation1 + $0x8] sm:$0xff pattern:$0x75316420]
    %v87 = vld.sshfl [vmem:[#allocation1 + $0x10] sm:$0xff pattern:$0x75316420]
    %vm88 = vcmask 31744
    %v90 = vsel %vm88, %v62, 0
    %v93 = vsel %vm88, %v63, 0
    %v96 = vsel %vm88, %v64, 0
    %v99 = vsel %vm88, %v65, 0
    %v102 = vsel %vm88, %v66, 0
    %v105 = vsel %vm88, %v67, 0
    %v108 = vsel %vm88, %v68, 0
    %v111 = vsel %vm88, %v69, 0
    %vm113 = vcmask 1043456
    %v114 = vsel %vm113, %v85, 0
    %v116 = vsel %vm113, %v86, 0
    %v118 = vsel %vm113, %v87, 0
    %120 = vmatpush.msra.mxu0 0.0
    %121 = vmatpush.msra.mxu0 0.0
    %122 = vmatpush.msra.mxu0 0.0
    %123 = vmatpush.msra.mxu0 0.0
    %124 = vmatpush.msra.mxu0 0.0
    %125 = vmatpush.msra.mxu0 0.0
    %126 = vmatpush.msra.mxu0 0.0
    %127 = vmatpush.msra.mxu0 0.0
    %128 = vmatpush.msra.mxu0 0.0
    %129 = vmatpush.msra.mxu0 0.0
    %130 = vmatpush.msra.mxu0 0.0
    %131 = vmatpush.msra.mxu0 0.0
    %132 = vmatpush.msra.mxu0 0.0
    %133 = vmatpush.msra.mxu0 0.0
    %134 = vmatpush.msra.mxu0 0.0
    %135 = vmatpush.msra.mxu0 %v114
    %136 = vmatmul.f32.gmra.mxu0 %v90
    %v137 = vpop.f32.mrf.mxu0
    %v138 = vadd.f32 %v74, %v137
    %139 = vmatmul.f32.gmra.mxu0 %v93
    %v140 = vpop.f32.mrf.mxu0
    %v141 = vadd.f32 %v74, %v140
    %142 = vmatmul.f32.gmra.mxu0 %v96
    %v143 = vpop.f32.mrf.mxu0
    %v144 = vadd.f32 %v74, %v143
    %145 = vmatmul.f32.gmra.mxu0 %v99
    %v146 = vpop.f32.mrf.mxu0
    %v147 = vadd.f32 %v74, %v146
    %148 = vmatmul.f32.gmra.mxu0 %v102
    %v149 = vpop.f32.mrf.mxu0
    %v150 = vadd.f32 %v74, %v149
    %151 = vmatmul.f32.gmra.mxu0 %v105
    %v152 = vpop.f32.mrf.mxu0
    %v153 = vadd.f32 %v74, %v152
    %154 = vmatmul.f32.gmra.mxu0 %v108
    %v155 = vpop.f32.mrf.mxu0
    %v156 = vadd.f32 %v74, %v155
    %157 = vmatmul.f32.gmra.mxu0 %v111
    %v158 = vpop.f32.mrf.mxu0
    %v159 = vadd.f32 %v74, %v158
    %160 = vdwg.mxu0
    %161 = vmatpush.msra.mxu0 0.0
    %162 = vmatpush.msra.mxu0 0.0
    %163 = vmatpush.msra.mxu0 0.0
    %164 = vmatpush.msra.mxu0 0.0
    %165 = vmatpush.msra.mxu0 0.0
    %166 = vmatpush.msra.mxu0 0.0
    %167 = vmatpush.msra.mxu0 0.0
    %168 = vmatpush.msra.mxu0 0.0
    %169 = vmatpush.msra.mxu0 0.0
    %170 = vmatpush.msra.mxu0 0.0
    %171 = vmatpush.msra.mxu0 0.0
    %172 = vmatpush.msra.mxu0 0.0
    %173 = vmatpush.msra.mxu0 0.0
    %174 = vmatpush.msra.mxu0 0.0
    %175 = vmatpush.msra.mxu0 0.0
    %176 = vmatpush.msra.mxu0 %v116
    %177 = vmatmul.f32.gmra.mxu0 %v90
    %v178 = vpop.f32.mrf.mxu0
    %v179 = vadd.f32 %v75, %v178
    %180 = vmatmul.f32.gmra.mxu0 %v93
    %v181 = vpop.f32.mrf.mxu0
    %v182 = vadd.f32 %v75, %v181
    %183 = vmatmul.f32.gmra.mxu0 %v96
    %v184 = vpop.f32.mrf.mxu0
    %v185 = vadd.f32 %v75, %v184
    %186 = vmatmul.f32.gmra.mxu0 %v99
    %v187 = vpop.f32.mrf.mxu0
    %v188 = vadd.f32 %v75, %v187
    %189 = vmatmul.f32.gmra.mxu0 %v102
    %v190 = vpop.f32.mrf.mxu0
    %v191 = vadd.f32 %v75, %v190
    %192 = vmatmul.f32.gmra.mxu0 %v105
    %v193 = vpop.f32.mrf.mxu0
    %v194 = vadd.f32 %v75, %v193
    %195 = vmatmul.f32.gmra.mxu0 %v108
    %v196 = vpop.f32.mrf.mxu0
    %v197 = vadd.f32 %v75, %v196
    %198 = vmatmul.f32.gmra.mxu0 %v111
    %v199 = vpop.f32.mrf.mxu0
    %v200 = vadd.f32 %v75, %v199
    %201 = vdwg.mxu0
    %202 = vmatpush.msra.mxu0 0.0
    %203 = vmatpush.msra.mxu0 0.0
    %204 = vmatpush.msra.mxu0 0.0
    %205 = vmatpush.msra.mxu0 0.0
    %206 = vmatpush.msra.mxu0 0.0
    %207 = vmatpush.msra.mxu0 0.0
    %208 = vmatpush.msra.mxu0 0.0
    %209 = vmatpush.msra.mxu0 0.0
    %210 = vmatpush.msra.mxu0 0.0
    %211 = vmatpush.msra.mxu0 0.0
    %212 = vmatpush.msra.mxu0 0.0
    %213 = vmatpush.msra.mxu0 0.0
    %214 = vmatpush.msra.mxu0 0.0
    %215 = vmatpush.msra.mxu0 0.0
    %216 = vmatpush.msra.mxu0 0.0
    %217 = vmatpush.msra.mxu0 %v118
    %218 = vmatmul.f32.gmra.mxu0 %v90
    %v219 = vpop.f32.mrf.mxu0
    %v220 = vadd.f32 %v76, %v219
    %221 = vmatmul.f32.gmra.mxu0 %v93
    %v222 = vpop.f32.mrf.mxu0
    %v223 = vadd.f32 %v76, %v222
    %224 = vmatmul.f32.gmra.mxu0 %v96
    %v225 = vpop.f32.mrf.mxu0
    %v226 = vadd.f32 %v76, %v225
    %227 = vmatmul.f32.gmra.mxu0 %v99
    %v228 = vpop.f32.mrf.mxu0
    %v229 = vadd.f32 %v76, %v228
    %230 = vmatmul.f32.gmra.mxu0 %v102
    %v231 = vpop.f32.mrf.mxu0
    %v232 = vadd.f32 %v76, %v231
    %233 = vmatmul.f32.gmra.mxu0 %v105
    %v234 = vpop.f32.mrf.mxu0
    %v235 = vadd.f32 %v76, %v234
    %236 = vmatmul.f32.gmra.mxu0 %v108
    %v237 = vpop.f32.mrf.mxu0
    %v238 = vadd.f32 %v76, %v237
    %239 = vmatmul.f32.gmra.mxu0 %v111
    %v240 = vpop.f32.mrf.mxu0
    %v241 = vadd.f32 %v76, %v240
    %242 = vdwg.mxu0
    %243 = vst [vmem:[#allocation2] sm:$0xff] %v138
    %244 = vst [vmem:[#allocation2 + $0x8] sm:$0xff] %v179
    %245 = vst [vmem:[#allocation2 + $0x10] sm:$0xff] %v220
    %246 = vst [vmem:[#allocation2 + $0x18] sm:$0xff] %v141
    %247 = vst [vmem:[#allocation2 + $0x20] sm:$0xff] %v182
    %248 = vst [vmem:[#allocation2 + $0x28] sm:$0xff] %v223
    %249 = vst [vmem:[#allocation2 + $0x30] sm:$0xff] %v144
    %250 = vst [vmem:[#allocation2 + $0x38] sm:$0xff] %v185
    %251 = vst [vmem:[#allocation2 + $0x40] sm:$0xff] %v226
    %252 = vst [vmem:[#allocation2 + $0x48] sm:$0xff] %v147
    %253 = vst [vmem:[#allocation2 + $0x50] sm:$0xff] %v188
    %254 = vst [vmem:[#allocation2 + $0x58] sm:$0xff] %v229
    %255 = vst [vmem:[#allocation2 + $0x60] sm:$0xff] %v150
    %256 = vst [vmem:[#allocation2 + $0x68] sm:$0xff] %v191
    %257 = vst [vmem:[#allocation2 + $0x70] sm:$0xff] %v232
    %258 = vst [vmem:[#allocation2 + $0x78] sm:$0xff] %v153
    %259 = vst [vmem:[#allocation2 + $0x80] sm:$0xff] %v194
    %260 = vst [vmem:[#allocation2 + $0x88] sm:$0xff] %v235
    %261 = vst [vmem:[#allocation2 + $0x90] sm:$0xff] %v156
    %262 = vst [vmem:[#allocation2 + $0x98] sm:$0xff] %v197
    %263 = vst [vmem:[#allocation2 + $0xa0] sm:$0xff] %v238
    %264 = vst [vmem:[#allocation2 + $0xa8] sm:$0xff] %v159
    %265 = vst [vmem:[#allocation2 + $0xb0] sm:$0xff] %v200
    %266 = vst [vmem:[#allocation2 + $0xb8] sm:$0xff] %v241
    %s267 = scalar_lea.vmem %s3, 1
    %v268 = vld [vmem:[%s267] ss:$2 sm:$0x7]
    %v270 = vperm.slane %v268, 0
    %v271 = vperm.slane %v268, 1
    %v272 = vperm.slane %v268, 2
    %v276 = vld [vmem:[%s6] sm:$0xff]
    %v277 = vld [vmem:[#allocation2] sm:$0xff]
    %v278 = vld [vmem:[#allocation2 + $0x8] sm:$0xff]
    %v279 = vld [vmem:[#allocation2 + $0x10] sm:$0xff]
    %v280 = vld [vmem:[#allocation4] sm:$0xff]
    %v281 = vld [vmem:[#allocation4 + $0x8] sm:$0xff]
    %v282 = vld [vmem:[#allocation4 + $0x10] sm:$0xff]
    %v283 = vld [vmem:[#allocation4 + $0x18] sm:$0xff]
    %v284 = vld [vmem:[#allocation4 + $0x20] sm:$0xff]
    %v285 = vld [vmem:[#allocation4 + $0x28] sm:$0xff]
    %v286 = vld [vmem:[#allocation4 + $0x30] sm:$0xff]
    %v287 = vld [vmem:[#allocation4 + $0x38] sm:$0xff]
    %v288 = vld [vmem:[#allocation4 + $0x40] sm:$0xff]
    %v289 = vld [vmem:[#allocation4 + $0x48] sm:$0xff]
    %v290 = vld [vmem:[#allocation4 + $0x50] sm:$0xff]
    %v291 = vld [vmem:[#allocation4 + $0x58] sm:$0xff]
    %v292 = vld [vmem:[#allocation4 + $0x60] sm:$0xff]
    %v293 = vld [vmem:[#allocation4 + $0x68] sm:$0xff]
    %v294 = vld [vmem:[#allocation4 + $0x70] sm:$0xff]
    %v295 = vld [vmem:[#allocation4 + $0x78] sm:$0xff]
    %v296 = vld [vmem:[#allocation4 + $0x80] sm:$0xff]
    %v297 = vld [vmem:[#allocation4 + $0x88] sm:$0xff]
    %v298 = vld [vmem:[#allocation4 + $0x90] sm:$0xff]
    %v299 = vld [vmem:[#allocation4 + $0x98] sm:$0xff]
    %v300 = vld [vmem:[#allocation4 + $0xa0] sm:$0xff]
    %v301 = vld [vmem:[#allocation4 + $0xa8] sm:$0xff]
    %v302 = vld [vmem:[#allocation4 + $0xb0] sm:$0xff]
    %v303 = vld [vmem:[#allocation4 + $0xb8] sm:$0xff]
    %v304 = vld [vmem:[#allocation4 + $0xc0] sm:$0xff]
    %v305 = vld [vmem:[#allocation4 + $0xc8] sm:$0xff]
    %v306 = vld [vmem:[#allocation4 + $0xd0] sm:$0xff]
    %v307 = vld [vmem:[#allocation4 + $0xd8] sm:$0xff]
    %v308 = vld [vmem:[#allocation4 + $0xe0] sm:$0xff]
    %v309 = vld [vmem:[#allocation4 + $0xe8] sm:$0xff]
    %v310 = vld [vmem:[#allocation4 + $0xf0] sm:$0xff]
    %v311 = vld [vmem:[#allocation4 + $0xf8] sm:$0xff]
    %v312 = vld [vmem:[#allocation4 + $0x100] sm:$0xff]
    %v313 = vld [vmem:[#allocation4 + $0x108] sm:$0xff]
    %v314 = vld [vmem:[#allocation4 + $0x110] sm:$0xff]
    %v315 = vld [vmem:[#allocation4 + $0x118] sm:$0xff]
    %v316 = vld [vmem:[#allocation4 + $0x120] sm:$0xff]
    %v317 = vld [vmem:[#allocation4 + $0x128] sm:$0xff]
    %v318 = vld [vmem:[#allocation4 + $0x130] sm:$0xff]
    %v319 = vld [vmem:[#allocation4 + $0x138] sm:$0xff]
    %v320 = vld [vmem:[#allocation4 + $0x140] sm:$0xff]
    %v321 = vld [vmem:[#allocation4 + $0x148] sm:$0xff]
    %v322 = vld [vmem:[#allocation4 + $0x150] sm:$0xff]
    %v323 = vld [vmem:[#allocation4 + $0x158] sm:$0xff]
    %v324 = vld [vmem:[#allocation4 + $0x160] sm:$0xff]
    %v325 = vld [vmem:[#allocation4 + $0x168] sm:$0xff]
    %v326 = vld [vmem:[#allocation4 + $0x170] sm:$0xff]
    %v327 = vld [vmem:[#allocation4 + $0x178] sm:$0xff]
    %328 = vmatpush.msra.mxu0 %v325
    %329 = vmatpush.msra.mxu0 %v322
    %330 = vmatpush.msra.mxu0 %v319
    %331 = vmatpush.msra.mxu0 %v316
    %332 = vmatpush.msra.mxu0 %v313
    %333 = vmatpush.msra.mxu0 %v310
    %334 = vmatpush.msra.mxu0 %v307
    %335 = vmatpush.msra.mxu0 %v304
    %336 = vmatpush.msra.mxu0 %v301
    %337 = vmatpush.msra.mxu0 %v298
    %338 = vmatpush.msra.mxu0 %v295
    %339 = vmatpush.msra.mxu0 %v292
    %340 = vmatpush.msra.mxu0 %v289
    %341 = vmatpush.msra.mxu0 %v286
    %342 = vmatpush.msra.mxu0 %v283
    %343 = vmatpush.msra.mxu0 %v280
    %344 = vmatmul.f32.gmra.mxu0 %v276
    %v345 = vpop.f32.mrf.mxu0
    %v346 = vadd.f32 %v270, %v345
    %347 = vdwg.mxu0
    %348 = vmatpush.msra.mxu0 %v326
    %349 = vmatpush.msra.mxu0 %v323
    %350 = vmatpush.msra.mxu0 %v320
    %351 = vmatpush.msra.mxu0 %v317
    %352 = vmatpush.msra.mxu0 %v314
    %353 = vmatpush.msra.mxu0 %v311
    %354 = vmatpush.msra.mxu0 %v308
    %355 = vmatpush.msra.mxu0 %v305
    %356 = vmatpush.msra.mxu0 %v302
    %357 = vmatpush.msra.mxu0 %v299
    %358 = vmatpush.msra.mxu0 %v296
    %359 = vmatpush.msra.mxu0 %v293
    %360 = vmatpush.msra.mxu0 %v290
    %361 = vmatpush.msra.mxu0 %v287
    %362 = vmatpush.msra.mxu0 %v284
    %363 = vmatpush.msra.mxu0 %v281
    %364 = vmatmul.f32.gmra.mxu0 %v276
    %v365 = vpop.f32.mrf.mxu0
    %v366 = vadd.f32 %v271, %v365
    %367 = vdwg.mxu0
    %368 = vmatpush.msra.mxu0 %v327
    %369 = vmatpush.msra.mxu0 %v324
    %370 = vmatpush.msra.mxu0 %v321
    %371 = vmatpush.msra.mxu0 %v318
    %372 = vmatpush.msra.mxu0 %v315
    %373 = vmatpush.msra.mxu0 %v312
    %374 = vmatpush.msra.mxu0 %v309
    %375 = vmatpush.msra.mxu0 %v306
    %376 = vmatpush.msra.mxu0 %v303
    %377 = vmatpush.msra.mxu0 %v300
    %378 = vmatpush.msra.mxu0 %v297
    %379 = vmatpush.msra.mxu0 %v294
    %380 = vmatpush.msra.mxu0 %v291
    %381 = vmatpush.msra.mxu0 %v288
    %382 = vmatpush.msra.mxu0 %v285
    %383 = vmatpush.msra.mxu0 %v282
    %384 = vmatmul.f32.gmra.mxu0 %v276
    %v385 = vpop.f32.mrf.mxu0
    %v386 = vadd.f32 %v272, %v385
    %387 = vdwg.mxu0
    %v388 = vadd.f32 %v277, %v346
    %v389 = vadd.f32 %v278, %v366
    %v390 = vxor.u32 %v388, 2147483648
    %v391 = vxor.u32 %v389, 2147483648
    %v392 = vmul.f32 %v390, 1.442695
    %v393 = vpow.pop %v392
    %v394 = vmul.f32 %v391, 1.442695
    %v395 = vpow.pop %v394
    %v396 = vadd.f32 %v393, 1.0
    %v397 = vadd.f32 %v395, 1.0
    %v398 = vrcp.pop %v396
    %v399 = vmul.f32 %v396, %v398
    %v400 = vsub.f32 1.0, %v399
    %v401 = vmul.f32 %v398, %v400
    %v402 = vadd.f32 %v398, %v401
    %vm403 = vweird.f32 %v396
    %vm404 = vweird.f32 %v398
    %vm405 = vmor %vm403, %vm404
    %v406 = vsel %vm405, %v398, %v402
    %v407 = vand.u32 2147483647, %v396
    %vm408 = vcmp.eq.f32.partialorder %v407, 8.507059e+37
    %v409 = vand.u32 %v396, 2147483648
    %v410 = vor.u32 1.1754944e-38, %v409
    %v411 = vsel %vm408, %v410, %v406
    %v412 = vmul.f32 1.0, %v411
    %v413 = vrcp.pop %v397
    %v414 = vmul.f32 %v397, %v413
    %v415 = vsub.f32 1.0, %v414
    %v416 = vmul.f32 %v413, %v415
    %v417 = vadd.f32 %v413, %v416
    %vm418 = vweird.f32 %v397
    %vm419 = vweird.f32 %v413
    %vm420 = vmor %vm418, %vm419
    %v421 = vsel %vm420, %v413, %v417
    %v422 = vand.u32 2147483647, %v397
    %vm423 = vcmp.eq.f32.partialorder %v422, 8.507059e+37
    %v424 = vand.u32 %v397, 2147483648
    %v425 = vor.u32 1.1754944e-38, %v424
    %v426 = vsel %vm423, %v425, %v421
    %v427 = vmul.f32 1.0, %v426
    %v428 = vmul.f32 %v412, %v386
    %v429 = vadd.f32 %v279, %v428
    %v430 = vtanh.pop %v429
    %v431 = vsub.f32 1.0, %v427
    %v432 = vmul.f32 %v431, %v430
    %v433 = vmul.f32 %v427, %v276
    %v434 = vadd.f32 %v432, %v433
    %435 = vst [vmem:[#allocation3] sm:$0xff] %v434
    %v436 = vld [vmem:[#allocation2 + $0x18] sm:$0xff]
    %v437 = vld [vmem:[#allocation2 + $0x20] sm:$0xff]
    %v438 = vld [vmem:[#allocation2 + $0x28] sm:$0xff]
    %v439 = vld [vmem:[#allocation4] sm:$0xff]
    %v440 = vld [vmem:[#allocation4 + $0x8] sm:$0xff]
    %v441 = vld [vmem:[#allocation4 + $0x10] sm:$0xff]
    %v442 = vld [vmem:[#allocation4 + $0x18] sm:$0xff]
    %v443 = vld [vmem:[#allocation4 + $0x20] sm:$0xff]
    %v444 = vld [vmem:[#allocation4 + $0x28] sm:$0xff]
    %v445 = vld [vmem:[#allocation4 + $0x30] sm:$0xff]
    %v446 = vld [vmem:[#allocation4 + $0x38] sm:$0xff]
    %v447 = vld [vmem:[#allocation4 + $0x40] sm:$0xff]
    %v448 = vld [vmem:[#allocation4 + $0x48] sm:$0xff]
    %v449 = vld [vmem:[#allocation4 + $0x50] sm:$0xff]
    %v450 = vld [vmem:[#allocation4 + $0x58] sm:$0xff]
    %v451 = vld [vmem:[#allocation4 + $0x60] sm:$0xff]
    %v452 = vld [vmem:[#allocation4 + $0x68] sm:$0xff]
    %v453 = vld [vmem:[#allocation4 + $0x70] sm:$0xff]
    %v454 = vld [vmem:[#allocation4 + $0x78] sm:$0xff]
    %v455 = vld [vmem:[#allocation4 + $0x80] sm:$0xff]
    %v456 = vld [vmem:[#allocation4 + $0x88] sm:$0xff]
    %v457 = vld [vmem:[#allocation4 + $0x90] sm:$0xff]
    %v458 = vld [vmem:[#allocation4 + $0x98] sm:$0xff]
    %v459 = vld [vmem:[#allocation4 + $0xa0] sm:$0xff]
    %v460 = vld [vmem:[#allocation4 + $0xa8] sm:$0xff]
    %v461 = vld [vmem:[#allocation4 + $0xb0] sm:$0xff]
    %v462 = vld [vmem:[#allocation4 + $0xb8] sm:$0xff]
    %v463 = vld [vmem:[#allocation4 + $0xc0] sm:$0xff]
    %v464 = vld [vmem:[#allocation4 + $0xc8] sm:$0xff]
    %v465 = vld [vmem:[#allocation4 + $0xd0] sm:$0xff]
    %v466 = vld [vmem:[#allocation4 + $0xd8] sm:$0xff]
    %v467 = vld [vmem:[#allocation4 + $0xe0] sm:$0xff]
    %v468 = vld [vmem:[#allocation4 + $0xe8] sm:$0xff]
    %v469 = vld [vmem:[#allocation4 + $0xf0] sm:$0xff]
    %v470 = vld [vmem:[#allocation4 + $0xf8] sm:$0xff]
    %v471 = vld [vmem:[#allocation4 + $0x100] sm:$0xff]
    %v472 = vld [vmem:[#allocation4 + $0x108] sm:$0xff]
    %v473 = vld [vmem:[#allocation4 + $0x110] sm:$0xff]
    %v474 = vld [vmem:[#allocation4 + $0x118] sm:$0xff]
    %v475 = vld [vmem:[#allocation4 + $0x120] sm:$0xff]
    %v476 = vld [vmem:[#allocation4 + $0x128] sm:$0xff]
    %v477 = vld [vmem:[#allocation4 + $0x130] sm:$0xff]
    %v478 = vld [vmem:[#allocation4 + $0x138] sm:$0xff]
    %v479 = vld [vmem:[#allocation4 + $0x140] sm:$0xff]
    %v480 = vld [vmem:[#allocation4 + $0x148] sm:$0xff]
    %v481 = vld [vmem:[#allocation4 + $0x150] sm:$0xff]
    %v482 = vld [vmem:[#allocation4 + $0x158] sm:$0xff]
    %v483 = vld [vmem:[#allocation4 + $0x160] sm:$0xff]
    %v484 = vld [vmem:[#allocation4 + $0x168] sm:$0xff]
    %v485 = vld [vmem:[#allocation4 + $0x170] sm:$0xff]
    %v486 = vld [vmem:[#allocation4 + $0x178] sm:$0xff]
    %487 = vmatpush.msra.mxu0 %v484
    %488 = vmatpush.msra.mxu0 %v481
    %489 = vmatpush.msra.mxu0 %v478
    %490 = vmatpush.msra.mxu0 %v475
    %491 = vmatpush.msra.mxu0 %v472
    %492 = vmatpush.msra.mxu0 %v469
    %493 = vmatpush.msra.mxu0 %v466
    %494 = vmatpush.msra.mxu0 %v463
    %495 = vmatpush.msra.mxu0 %v460
    %496 = vmatpush.msra.mxu0 %v457
    %497 = vmatpush.msra.mxu0 %v454
    %498 = vmatpush.msra.mxu0 %v451
    %499 = vmatpush.msra.mxu0 %v448
    %500 = vmatpush.msra.mxu0 %v445
    %501 = vmatpush.msra.mxu0 %v442
    %502 = vmatpush.msra.mxu0 %v439
    %503 = vmatmul.f32.gmra.mxu0 %v434
    %v504 = vpop.f32.mrf.mxu0
    %v505 = vadd.f32 %v270, %v504
    %506 = vdwg.mxu0
    %507 = vmatpush.msra.mxu0 %v485
    %508 = vmatpush.msra.mxu0 %v482
    %509 = vmatpush.msra.mxu0 %v479
    %510 = vmatpush.msra.mxu0 %v476
    %511 = vmatpush.msra.mxu0 %v473
    %512 = vmatpush.msra.mxu0 %v470
    %513 = vmatpush.msra.mxu0 %v467
    %514 = vmatpush.msra.mxu0 %v464
    %515 = vmatpush.msra.mxu0 %v461
    %516 = vmatpush.msra.mxu0 %v458
    %517 = vmatpush.msra.mxu0 %v455
    %518 = vmatpush.msra.mxu0 %v452
    %519 = vmatpush.msra.mxu0 %v449
    %520 = vmatpush.msra.mxu0 %v446
    %521 = vmatpush.msra.mxu0 %v443
    %522 = vmatpush.msra.mxu0 %v440
    %523 = vmatmul.f32.gmra.mxu0 %v434
    %v524 = vpop.f32.mrf.mxu0
    %v525 = vadd.f32 %v271, %v524
    %526 = vdwg.mxu0
    %527 = vmatpush.msra.mxu0 %v486
    %528 = vmatpush.msra.mxu0 %v483
    %529 = vmatpush.msra.mxu0 %v480
    %530 = vmatpush.msra.mxu0 %v477
    %531 = vmatpush.msra.mxu0 %v474
    %532 = vmatpush.msra.mxu0 %v471
    %533 = vmatpush.msra.mxu0 %v468
    %534 = vmatpush.msra.mxu0 %v465
    %535 = vmatpush.msra.mxu0 %v462
    %536 = vmatpush.msra.mxu0 %v459
    %537 = vmatpush.msra.mxu0 %v456
    %538 = vmatpush.msra.mxu0 %v453
    %539 = vmatpush.msra.mxu0 %v450
    %540 = vmatpush.msra.mxu0 %v447
    %541 = vmatpush.msra.mxu0 %v444
    %542 = vmatpush.msra.mxu0 %v441
    %543 = vmatmul.f32.gmra.mxu0 %v434
    %v544 = vpop.f32.mrf.mxu0
    %v545 = vadd.f32 %v272, %v544
    %546 = vdwg.mxu0
    %v547 = vadd.f32 %v436, %v505
    %v548 = vadd.f32 %v437, %v525
    %v549 = vxor.u32 %v547, 2147483648
    %v550 = vxor.u32 %v548, 2147483648
    %v551 = vmul.f32 %v549, 1.442695
    %v552 = vpow.pop %v551
    %v553 = vmul.f32 %v550, 1.442695
    %v554 = vpow.pop %v553
    %v555 = vadd.f32 %v552, 1.0
    %v556 = vadd.f32 %v554, 1.0
    %v557 = vrcp.pop %v555
    %v558 = vmul.f32 %v555, %v557
    %v559 = vsub.f32 1.0, %v558
    %v560 = vmul.f32 %v557, %v559
    %v561 = vadd.f32 %v557, %v560
    %vm562 = vweird.f32 %v555
    %vm563 = vweird.f32 %v557
    %vm564 = vmor %vm562, %vm563
    %v565 = vsel %vm564, %v557, %v561
    %v566 = vand.u32 2147483647, %v555
    %vm567 = vcmp.eq.f32.partialorder %v566, 8.507059e+37
    %v568 = vand.u32 %v555, 2147483648
    %v569 = vor.u32 1.1754944e-38, %v568
    %v570 = vsel %vm567, %v569, %v565
    %v571 = vmul.f32 1.0, %v570
    %v572 = vrcp.pop %v556
    %v573 = vmul.f32 %v556, %v572
    %v574 = vsub.f32 1.0, %v573
    %v575 = vmul.f32 %v572, %v574
    %v576 = vadd.f32 %v572, %v575
    %vm577 = vweird.f32 %v556
    %vm578 = vweird.f32 %v572
    %vm579 = vmor %vm577, %vm578
    %v580 = vsel %vm579, %v572, %v576
    %v581 = vand.u32 2147483647, %v556
    %vm582 = vcmp.eq.f32.partialorder %v581, 8.507059e+37
    %v583 = vand.u32 %v556, 2147483648
    %v584 = vor.u32 1.1754944e-38, %v583
    %v585 = vsel %vm582, %v584, %v580
    %v586 = vmul.f32 1.0, %v585
    %v587 = vmul.f32 %v571, %v545
    %v588 = vadd.f32 %v438, %v587
    %v589 = vtanh.pop %v588
    %v590 = vsub.f32 1.0, %v586
    %v591 = vmul.f32 %v590, %v589
    %v592 = vmul.f32 %v586, %v434
    %v593 = vadd.f32 %v591, %v592
    %594 = vst [vmem:[#allocation3 + $0x8] sm:$0xff] %v593
    %v595 = vld [vmem:[#allocation2 + $0x30] sm:$0xff]
    %v596 = vld [vmem:[#allocation2 + $0x38] sm:$0xff]
    %v597 = vld [vmem:[#allocation2 + $0x40] sm:$0xff]
    %v598 = vld [vmem:[#allocation4] sm:$0xff]
    %v599 = vld [vmem:[#allocation4 + $0x8] sm:$0xff]
    %v600 = vld [vmem:[#allocation4 + $0x10] sm:$0xff]
    %v601 = vld [vmem:[#allocation4 + $0x18] sm:$0xff]
    %v602 = vld [vmem:[#allocation4 + $0x20] sm:$0xff]
    %v603 = vld [vmem:[#allocation4 + $0x28] sm:$0xff]
    %v604 = vld [vmem:[#allocation4 + $0x30] sm:$0xff]
    %v605 = vld [vmem:[#allocation4 + $0x38] sm:$0xff]
    %v606 = vld [vmem:[#allocation4 + $0x40] sm:$0xff]
    %v607 = vld [vmem:[#allocation4 + $0x48] sm:$0xff]
    %v608 = vld [vmem:[#allocation4 + $0x50] sm:$0xff]
    %v609 = vld [vmem:[#allocation4 + $0x58] sm:$0xff]
    %v610 = vld [vmem:[#allocation4 + $0x60] sm:$0xff]
    %v611 = vld [vmem:[#allocation4 + $0x68] sm:$0xff]
    %v612 = vld [vmem:[#allocation4 + $0x70] sm:$0xff]
    %v613 = vld [vmem:[#allocation4 + $0x78] sm:$0xff]
    %v614 = vld [vmem:[#allocation4 + $0x80] sm:$0xff]
    %v615 = vld [vmem:[#allocation4 + $0x88] sm:$0xff]
    %v616 = vld [vmem:[#allocation4 + $0x90] sm:$0xff]
    %v617 = vld [vmem:[#allocation4 + $0x98] sm:$0xff]
    %v618 = vld [vmem:[#allocation4 + $0xa0] sm:$0xff]
    %v619 = vld [vmem:[#allocation4 + $0xa8] sm:$0xff]
    %v620 = vld [vmem:[#allocation4 + $0xb0] sm:$0xff]
    %v621 = vld [vmem:[#allocation4 + $0xb8] sm:$0xff]
    %v622 = vld [vmem:[#allocation4 + $0xc0] sm:$0xff]
    %v623 = vld [vmem:[#allocation4 + $0xc8] sm:$0xff]
    %v624 = vld [vmem:[#allocation4 + $0xd0] sm:$0xff]
    %v625 = vld [vmem:[#allocation4 + $0xd8] sm:$0xff]
    %v626 = vld [vmem:[#allocation4 + $0xe0] sm:$0xff]
    %v627 = vld [vmem:[#allocation4 + $0xe8] sm:$0xff]
    %v628 = vld [vmem:[#allocation4 + $0xf0] sm:$0xff]
    %v629 = vld [vmem:[#allocation4 + $0xf8] sm:$0xff]
    %v630 = vld [vmem:[#allocation4 + $0x100] sm:$0xff]
    %v631 = vld [vmem:[#allocation4 + $0x108] sm:$0xff]
    %v632 = vld [vmem:[#allocation4 + $0x110] sm:$0xff]
    %v633 = vld [vmem:[#allocation4 + $0x118] sm:$0xff]
    %v634 = vld [vmem:[#allocation4 + $0x120] sm:$0xff]
    %v635 = vld [vmem:[#allocation4 + $0x128] sm:$0xff]
    %v636 = vld [vmem:[#allocation4 + $0x130] sm:$0xff]
    %v637 = vld [vmem:[#allocation4 + $0x138] sm:$0xff]
    %v638 = vld [vmem:[#allocation4 + $0x140] sm:$0xff]
    %v639 = vld [vmem:[#allocation4 + $0x148] sm:$0xff]
    %v640 = vld [vmem:[#allocation4 + $0x150] sm:$0xff]
    %v641 = vld [vmem:[#allocation4 + $0x158] sm:$0xff]
    %v642 = vld [vmem:[#allocation4 + $0x160] sm:$0xff]
    %v643 = vld [vmem:[#allocation4 + $0x168] sm:$0xff]
    %v644 = vld [vmem:[#allocation4 + $0x170] sm:$0xff]
    %v645 = vld [vmem:[#allocation4 + $0x178] sm:$0xff]
    %646 = vmatpush.msra.mxu0 %v643
    %647 = vmatpush.msra.mxu0 %v640
    %648 = vmatpush.msra.mxu0 %v637
    %649 = vmatpush.msra.mxu0 %v634
    %650 = vmatpush.msra.mxu0 %v631
    %651 = vmatpush.msra.mxu0 %v628
    %652 = vmatpush.msra.mxu0 %v625
    %653 = vmatpush.msra.mxu0 %v622
    %654 = vmatpush.msra.mxu0 %v619
    %655 = vmatpush.msra.mxu0 %v616
    %656 = vmatpush.msra.mxu0 %v613
    %657 = vmatpush.msra.mxu0 %v610
    %658 = vmatpush.msra.mxu0 %v607
    %659 = vmatpush.msra.mxu0 %v604
    %660 = vmatpush.msra.mxu0 %v601
    %661 = vmatpush.msra.mxu0 %v598
    %662 = vmatmul.f32.gmra.mxu0 %v593
    %v663 = vpop.f32.mrf.mxu0
    %v664 = vadd.f32 %v270, %v663
    %665 = vdwg.mxu0
    %666 = vmatpush.msra.mxu0 %v644
    %667 = vmatpush.msra.mxu0 %v641
    %668 = vmatpush.msra.mxu0 %v638
    %669 = vmatpush.msra.mxu0 %v635
    %670 = vmatpush.msra.mxu0 %v632
    %671 = vmatpush.msra.mxu0 %v629
    %672 = vmatpush.msra.mxu0 %v626
    %673 = vmatpush.msra.mxu0 %v623
    %674 = vmatpush.msra.mxu0 %v620
    %675 = vmatpush.msra.mxu0 %v617
    %676 = vmatpush.msra.mxu0 %v614
    %677 = vmatpush.msra.mxu0 %v611
    %678 = vmatpush.msra.mxu0 %v608
    %679 = vmatpush.msra.mxu0 %v605
    %680 = vmatpush.msra.mxu0 %v602
    %681 = vmatpush.msra.mxu0 %v599
    %682 = vmatmul.f32.gmra.mxu0 %v593
    %v683 = vpop.f32.mrf.mxu0
    %v684 = vadd.f32 %v271, %v683
    %685 = vdwg.mxu0
    %686 = vmatpush.msra.mxu0 %v645
    %687 = vmatpush.msra.mxu0 %v642
    %688 = vmatpush.msra.mxu0 %v639
    %689 = vmatpush.msra.mxu0 %v636
    %690 = vmatpush.msra.mxu0 %v633
    %691 = vmatpush.msra.mxu0 %v630
    %692 = vmatpush.msra.mxu0 %v627
    %693 = vmatpush.msra.mxu0 %v624
    %694 = vmatpush.msra.mxu0 %v621
    %695 = vmatpush.msra.mxu0 %v618
    %696 = vmatpush.msra.mxu0 %v615
    %697 = vmatpush.msra.mxu0 %v612
    %698 = vmatpush.msra.mxu0 %v609
    %699 = vmatpush.msra.mxu0 %v606
    %700 = vmatpush.msra.mxu0 %v603
    %701 = vmatpush.msra.mxu0 %v600
    %702 = vmatmul.f32.gmra.mxu0 %v593
    %v703 = vpop.f32.mrf.mxu0
    %v704 = vadd.f32 %v272, %v703
    %705 = vdwg.mxu0
    %v706 = vadd.f32 %v595, %v664
    %v707 = vadd.f32 %v596, %v684
    %v708 = vxor.u32 %v706, 2147483648
    %v709 = vxor.u32 %v707, 2147483648
    %v710 = vmul.f32 %v708, 1.442695
    %v711 = vpow.pop %v710
    %v712 = vmul.f32 %v709, 1.442695
    %v713 = vpow.pop %v712
    %v714 = vadd.f32 %v711, 1.0
    %v715 = vadd.f32 %v713, 1.0
    %v716 = vrcp.pop %v714
    %v717 = vmul.f32 %v714, %v716
    %v718 = vsub.f32 1.0, %v717
    %v719 = vmul.f32 %v716, %v718
    %v720 = vadd.f32 %v716, %v719
    %vm721 = vweird.f32 %v714
    %vm722 = vweird.f32 %v716
    %vm723 = vmor %vm721, %vm722
    %v724 = vsel %vm723, %v716, %v720
    %v725 = vand.u32 2147483647, %v714
    %vm726 = vcmp.eq.f32.partialorder %v725, 8.507059e+37
    %v727 = vand.u32 %v714, 2147483648
    %v728 = vor.u32 1.1754944e-38, %v727
    %v729 = vsel %vm726, %v728, %v724
    %v730 = vmul.f32 1.0, %v729
    %v731 = vrcp.pop %v715
    %v732 = vmul.f32 %v715, %v731
    %v733 = vsub.f32 1.0, %v732
    %v734 = vmul.f32 %v731, %v733
    %v735 = vadd.f32 %v731, %v734
    %vm736 = vweird.f32 %v715
    %vm737 = vweird.f32 %v731
    %vm738 = vmor %vm736, %vm737
    %v739 = vsel %vm738, %v731, %v735
    %v740 = vand.u32 2147483647, %v715
    %vm741 = vcmp.eq.f32.partialorder %v740, 8.507059e+37
    %v742 = vand.u32 %v715, 2147483648
    %v743 = vor.u32 1.1754944e-38, %v742
    %v744 = vsel %vm741, %v743, %v739
    %v745 = vmul.f32 1.0, %v744
    %v746 = vmul.f32 %v730, %v704
    %v747 = vadd.f32 %v597, %v746
    %v748 = vtanh.pop %v747
    %v749 = vsub.f32 1.0, %v745
    %v750 = vmul.f32 %v749, %v748
    %v751 = vmul.f32 %v745, %v593
    %v752 = vadd.f32 %v750, %v751
    %753 = vst [vmem:[#allocation3 + $0x10] sm:$0xff] %v752
    %v754 = vld [vmem:[#allocation2 + $0x48] sm:$0xff]
    %v755 = vld [vmem:[#allocation2 + $0x50] sm:$0xff]
    %v756 = vld [vmem:[#allocation2 + $0x58] sm:$0xff]
    %v757 = vld [vmem:[#allocation4] sm:$0xff]
    %v758 = vld [vmem:[#allocation4 + $0x8] sm:$0xff]
    %v759 = vld [vmem:[#allocation4 + $0x10] sm:$0xff]
    %v760 = vld [vmem:[#allocation4 + $0x18] sm:$0xff]
    %v761 = vld [vmem:[#allocation4 + $0x20] sm:$0xff]
    %v762 = vld [vmem:[#allocation4 + $0x28] sm:$0xff]
    %v763 = vld [vmem:[#allocation4 + $0x30] sm:$0xff]
    %v764 = vld [vmem:[#allocation4 + $0x38] sm:$0xff]
    %v765 = vld [vmem:[#allocation4 + $0x40] sm:$0xff]
    %v766 = vld [vmem:[#allocation4 + $0x48] sm:$0xff]
    %v767 = vld [vmem:[#allocation4 + $0x50] sm:$0xff]
    %v768 = vld [vmem:[#allocation4 + $0x58] sm:$0xff]
    %v769 = vld [vmem:[#allocation4 + $0x60] sm:$0xff]
    %v770 = vld [vmem:[#allocation4 + $0x68] sm:$0xff]
    %v771 = vld [vmem:[#allocation4 + $0x70] sm:$0xff]
    %v772 = vld [vmem:[#allocation4 + $0x78] sm:$0xff]
    %v773 = vld [vmem:[#allocation4 + $0x80] sm:$0xff]
    %v774 = vld [vmem:[#allocation4 + $0x88] sm:$0xff]
    %v775 = vld [vmem:[#allocation4 + $0x90] sm:$0xff]
    %v776 = vld [vmem:[#allocation4 + $0x98] sm:$0xff]
    %v777 = vld [vmem:[#allocation4 + $0xa0] sm:$0xff]
    %v778 = vld [vmem:[#allocation4 + $0xa8] sm:$0xff]
    %v779 = vld [vmem:[#allocation4 + $0xb0] sm:$0xff]
    %v780 = vld [vmem:[#allocation4 + $0xb8] sm:$0xff]
    %v781 = vld [vmem:[#allocation4 + $0xc0] sm:$0xff]
    %v782 = vld [vmem:[#allocation4 + $0xc8] sm:$0xff]
    %v783 = vld [vmem:[#allocation4 + $0xd0] sm:$0xff]
    %v784 = vld [vmem:[#allocation4 + $0xd8] sm:$0xff]
    %v785 = vld [vmem:[#allocation4 + $0xe0] sm:$0xff]
    %v786 = vld [vmem:[#allocation4 + $0xe8] sm:$0xff]
    %v787 = vld [vmem:[#allocation4 + $0xf0] sm:$0xff]
    %v788 = vld [vmem:[#allocation4 + $0xf8] sm:$0xff]
    %v789 = vld [vmem:[#allocation4 + $0x100] sm:$0xff]
    %v790 = vld [vmem:[#allocation4 + $0x108] sm:$0xff]
    %v791 = vld [vmem:[#allocation4 + $0x110] sm:$0xff]
    %v792 = vld [vmem:[#allocation4 + $0x118] sm:$0xff]
    %v793 = vld [vmem:[#allocation4 + $0x120] sm:$0xff]
    %v794 = vld [vmem:[#allocation4 + $0x128] sm:$0xff]
    %v795 = vld [vmem:[#allocation4 + $0x130] sm:$0xff]
    %v796 = vld [vmem:[#allocation4 + $0x138] sm:$0xff]
    %v797 = vld [vmem:[#allocation4 + $0x140] sm:$0xff]
    %v798 = vld [vmem:[#allocation4 + $0x148] sm:$0xff]
    %v799 = vld [vmem:[#allocation4 + $0x150] sm:$0xff]
    %v800 = vld [vmem:[#allocation4 + $0x158] sm:$0xff]
    %v801 = vld [vmem:[#allocation4 + $0x160] sm:$0xff]
    %v802 = vld [vmem:[#allocation4 + $0x168] sm:$0xff]
    %v803 = vld [vmem:[#allocation4 + $0x170] sm:$0xff]
    %v804 = vld [vmem:[#allocation4 + $0x178] sm:$0xff]
    %805 = vmatpush.msra.mxu0 %v802
    %806 = vmatpush.msra.mxu0 %v799
    %807 = vmatpush.msra.mxu0 %v796
    %808 = vmatpush.msra.mxu0 %v793
    %809 = vmatpush.msra.mxu0 %v790
    %810 = vmatpush.msra.mxu0 %v787
    %811 = vmatpush.msra.mxu0 %v784
    %812 = vmatpush.msra.mxu0 %v781
    %813 = vmatpush.msra.mxu0 %v778
    %814 = vmatpush.msra.mxu0 %v775
    %815 = vmatpush.msra.mxu0 %v772
    %816 = vmatpush.msra.mxu0 %v769
    %817 = vmatpush.msra.mxu0 %v766
    %818 = vmatpush.msra.mxu0 %v763
    %819 = vmatpush.msra.mxu0 %v760
    %820 = vmatpush.msra.mxu0 %v757
    %821 = vmatmul.f32.gmra.mxu0 %v752
    %v822 = vpop.f32.mrf.mxu0
    %v823 = vadd.f32 %v270, %v822
    %824 = vdwg.mxu0
    %825 = vmatpush.msra.mxu0 %v803
    %826 = vmatpush.msra.mxu0 %v800
    %827 = vmatpush.msra.mxu0 %v797
    %828 = vmatpush.msra.mxu0 %v794
    %829 = vmatpush.msra.mxu0 %v791
    %830 = vmatpush.msra.mxu0 %v788
    %831 = vmatpush.msra.mxu0 %v785
    %832 = vmatpush.msra.mxu0 %v782
    %833 = vmatpush.msra.mxu0 %v779
    %834 = vmatpush.msra.mxu0 %v776
    %835 = vmatpush.msra.mxu0 %v773
    %836 = vmatpush.msra.mxu0 %v770
    %837 = vmatpush.msra.mxu0 %v767
    %838 = vmatpush.msra.mxu0 %v764
    %839 = vmatpush.msra.mxu0 %v761
    %840 = vmatpush.msra.mxu0 %v758
    %841 = vmatmul.f32.gmra.mxu0 %v752
    %v842 = vpop.f32.mrf.mxu0
    %v843 = vadd.f32 %v271, %v842
    %844 = vdwg.mxu0
    %845 = vmatpush.msra.mxu0 %v804
    %846 = vmatpush.msra.mxu0 %v801
    %847 = vmatpush.msra.mxu0 %v798
    %848 = vmatpush.msra.mxu0 %v795
    %849 = vmatpush.msra.mxu0 %v792
    %850 = vmatpush.msra.mxu0 %v789
    %851 = vmatpush.msra.mxu0 %v786
    %852 = vmatpush.msra.mxu0 %v783
    %853 = vmatpush.msra.mxu0 %v780
    %854 = vmatpush.msra.mxu0 %v777
    %855 = vmatpush.msra.mxu0 %v774
    %856 = vmatpush.msra.mxu0 %v771
    %857 = vmatpush.msra.mxu0 %v768
    %858 = vmatpush.msra.mxu0 %v765
    %859 = vmatpush.msra.mxu0 %v762
    %860 = vmatpush.msra.mxu0 %v759
    %861 = vmatmul.f32.gmra.mxu0 %v752
    %v862 = vpop.f32.mrf.mxu0
    %v863 = vadd.f32 %v272, %v862
    %864 = vdwg.mxu0
    %v865 = vadd.f32 %v754, %v823
    %v866 = vadd.f32 %v755, %v843
    %v867 = vxor.u32 %v865, 2147483648
    %v868 = vxor.u32 %v866, 2147483648
    %v869 = vmul.f32 %v867, 1.442695
    %v870 = vpow.pop %v869
    %v871 = vmul.f32 %v868, 1.442695
    %v872 = vpow.pop %v871
    %v873 = vadd.f32 %v870, 1.0
    %v874 = vadd.f32 %v872, 1.0
    %v875 = vrcp.pop %v873
    %v876 = vmul.f32 %v873, %v875
    %v877 = vsub.f32 1.0, %v876
    %v878 = vmul.f32 %v875, %v877
    %v879 = vadd.f32 %v875, %v878
    %vm880 = vweird.f32 %v873
    %vm881 = vweird.f32 %v875
    %vm882 = vmor %vm880, %vm881
    %v883 = vsel %vm882, %v875, %v879
    %v884 = vand.u32 2147483647, %v873
    %vm885 = vcmp.eq.f32.partialorder %v884, 8.507059e+37
    %v886 = vand.u32 %v873, 2147483648
    %v887 = vor.u32 1.1754944e-38, %v886
    %v888 = vsel %vm885, %v887, %v883
    %v889 = vmul.f32 1.0, %v888
    %v890 = vrcp.pop %v874
    %v891 = vmul.f32 %v874, %v890
    %v892 = vsub.f32 1.0, %v891
    %v893 = vmul.f32 %v890, %v892
    %v894 = vadd.f32 %v890, %v893
    %vm895 = vweird.f32 %v874
    %vm896 = vweird.f32 %v890
    %vm897 = vmor %vm895, %vm896
    %v898 = vsel %vm897, %v890, %v894
    %v899 = vand.u32 2147483647, %v874
    %vm900 = vcmp.eq.f32.partialorder %v899, 8.507059e+37
    %v901 = vand.u32 %v874, 2147483648
    %v902 = vor.u32 1.1754944e-38, %v901
    %v903 = vsel %vm900, %v902, %v898
    %v904 = vmul.f32 1.0, %v903
    %v905 = vmul.f32 %v889, %v863
    %v906 = vadd.f32 %v756, %v905
    %v907 = vtanh.pop %v906
    %v908 = vsub.f32 1.0, %v904
    %v909 = vmul.f32 %v908, %v907
    %v910 = vmul.f32 %v904, %v752
    %v911 = vadd.f32 %v909, %v910
    %912 = vst [vmem:[#allocation3 + $0x18] sm:$0xff] %v911
    %v913 = vld [vmem:[#allocation2 + $0x60] sm:$0xff]
    %v914 = vld [vmem:[#allocation2 + $0x68] sm:$0xff]
    %v915 = vld [vmem:[#allocation2 + $0x70] sm:$0xff]
    %v916 = vld [vmem:[#allocation4] sm:$0xff]
    %v917 = vld [vmem:[#allocation4 + $0x8] sm:$0xff]
    %v918 = vld [vmem:[#allocation4 + $0x10] sm:$0xff]
    %v919 = vld [vmem:[#allocation4 + $0x18] sm:$0xff]
    %v920 = vld [vmem:[#allocation4 + $0x20] sm:$0xff]
    %v921 = vld [vmem:[#allocation4 + $0x28] sm:$0xff]
    %v922 = vld [vmem:[#allocation4 + $0x30] sm:$0xff]
    %v923 = vld [vmem:[#allocation4 + $0x38] sm:$0xff]
    %v924 = vld [vmem:[#allocation4 + $0x40] sm:$0xff]
    %v925 = vld [vmem:[#allocation4 + $0x48] sm:$0xff]
    %v926 = vld [vmem:[#allocation4 + $0x50] sm:$0xff]
    %v927 = vld [vmem:[#allocation4 + $0x58] sm:$0xff]
    %v928 = vld [vmem:[#allocation4 + $0x60] sm:$0xff]
    %v929 = vld [vmem:[#allocation4 + $0x68] sm:$0xff]
    %v930 = vld [vmem:[#allocation4 + $0x70] sm:$0xff]
    %v931 = vld [vmem:[#allocation4 + $0x78] sm:$0xff]
    %v932 = vld [vmem:[#allocation4 + $0x80] sm:$0xff]
    %v933 = vld [vmem:[#allocation4 + $0x88] sm:$0xff]
    %v934 = vld [vmem:[#allocation4 + $0x90] sm:$0xff]
    %v935 = vld [vmem:[#allocation4 + $0x98] sm:$0xff]
    %v936 = vld [vmem:[#allocation4 + $0xa0] sm:$0xff]
    %v937 = vld [vmem:[#allocation4 + $0xa8] sm:$0xff]
    %v938 = vld [vmem:[#allocation4 + $0xb0] sm:$0xff]
    %v939 = vld [vmem:[#allocation4 + $0xb8] sm:$0xff]
    %v940 = vld [vmem:[#allocation4 + $0xc0] sm:$0xff]
    %v941 = vld [vmem:[#allocation4 + $0xc8] sm:$0xff]
    %v942 = vld [vmem:[#allocation4 + $0xd0] sm:$0xff]
    %v943 = vld [vmem:[#allocation4 + $0xd8] sm:$0xff]
    %v944 = vld [vmem:[#allocation4 + $0xe0] sm:$0xff]
    %v945 = vld [vmem:[#allocation4 + $0xe8] sm:$0xff]
    %v946 = vld [vmem:[#allocation4 + $0xf0] sm:$0xff]
    %v947 = vld [vmem:[#allocation4 + $0xf8] sm:$0xff]
    %v948 = vld [vmem:[#allocation4 + $0x100] sm:$0xff]
    %v949 = vld [vmem:[#allocation4 + $0x108] sm:$0xff]
    %v950 = vld [vmem:[#allocation4 + $0x110] sm:$0xff]
    %v951 = vld [vmem:[#allocation4 + $0x118] sm:$0xff]
    %v952 = vld [vmem:[#allocation4 + $0x120] sm:$0xff]
    %v953 = vld [vmem:[#allocation4 + $0x128] sm:$0xff]
    %v954 = vld [vmem:[#allocation4 + $0x130] sm:$0xff]
    %v955 = vld [vmem:[#allocation4 + $0x138] sm:$0xff]
    %v956 = vld [vmem:[#allocation4 + $0x140] sm:$0xff]
    %v957 = vld [vmem:[#allocation4 + $0x148] sm:$0xff]
    %v958 = vld [vmem:[#allocation4 + $0x150] sm:$0xff]
    %v959 = vld [vmem:[#allocation4 + $0x158] sm:$0xff]
    %v960 = vld [vmem:[#allocation4 + $0x160] sm:$0xff]
    %v961 = vld [vmem:[#allocation4 + $0x168] sm:$0xff]
    %v962 = vld [vmem:[#allocation4 + $0x170] sm:$0xff]
    %v963 = vld [vmem:[#allocation4 + $0x178] sm:$0xff]
    %964 = vmatpush.msra.mxu0 %v961
    %965 = vmatpush.msra.mxu0 %v958
    %966 = vmatpush.msra.mxu0 %v955
    %967 = vmatpush.msra.mxu0 %v952
    %968 = vmatpush.msra.mxu0 %v949
    %969 = vmatpush.msra.mxu0 %v946
    %970 = vmatpush.msra.mxu0 %v943
    %971 = vmatpush.msra.mxu0 %v940
    %972 = vmatpush.msra.mxu0 %v937
    %973 = vmatpush.msra.mxu0 %v934
    %974 = vmatpush.msra.mxu0 %v931
    %975 = vmatpush.msra.mxu0 %v928
    %976 = vmatpush.msra.mxu0 %v925
    %977 = vmatpush.msra.mxu0 %v922
    %978 = vmatpush.msra.mxu0 %v919
    %979 = vmatpush.msra.mxu0 %v916
    %980 = vmatmul.f32.gmra.mxu0 %v911
    %v981 = vpop.f32.mrf.mxu0
    %v982 = vadd.f32 %v270, %v981
    %983 = vdwg.mxu0
    %984 = vmatpush.msra.mxu0 %v962
    %985 = vmatpush.msra.mxu0 %v959
    %986 = vmatpush.msra.mxu0 %v956
    %987 = vmatpush.msra.mxu0 %v953
    %988 = vmatpush.msra.mxu0 %v950
    %989 = vmatpush.msra.mxu0 %v947
    %990 = vmatpush.msra.mxu0 %v944
    %991 = vmatpush.msra.mxu0 %v941
    %992 = vmatpush.msra.mxu0 %v938
    %993 = vmatpush.msra.mxu0 %v935
    %994 = vmatpush.msra.mxu0 %v932
    %995 = vmatpush.msra.mxu0 %v929
    %996 = vmatpush.msra.mxu0 %v926
    %997 = vmatpush.msra.mxu0 %v923
    %998 = vmatpush.msra.mxu0 %v920
    %999 = vmatpush.msra.mxu0 %v917
    %1000 = vmatmul.f32.gmra.mxu0 %v911
    %v1001 = vpop.f32.mrf.mxu0
    %v1002 = vadd.f32 %v271, %v1001
    %1003 = vdwg.mxu0
    %1004 = vmatpush.msra.mxu0 %v963
    %1005 = vmatpush.msra.mxu0 %v960
    %1006 = vmatpush.msra.mxu0 %v957
    %1007 = vmatpush.msra.mxu0 %v954
    %1008 = vmatpush.msra.mxu0 %v951
    %1009 = vmatpush.msra.mxu0 %v948
    %1010 = vmatpush.msra.mxu0 %v945
    %1011 = vmatpush.msra.mxu0 %v942
    %1012 = vmatpush.msra.mxu0 %v939
    %1013 = vmatpush.msra.mxu0 %v936
    %1014 = vmatpush.msra.mxu0 %v933
    %1015 = vmatpush.msra.mxu0 %v930
    %1016 = vmatpush.msra.mxu0 %v927
    %1017 = vmatpush.msra.mxu0 %v924
    %1018 = vmatpush.msra.mxu0 %v921
    %1019 = vmatpush.msra.mxu0 %v918
    %1020 = vmatmul.f32.gmra.mxu0 %v911
    %v1021 = vpop.f32.mrf.mxu0
    %v1022 = vadd.f32 %v272, %v1021
    %1023 = vdwg.mxu0
    %v1024 = vadd.f32 %v913, %v982
    %v1025 = vadd.f32 %v914, %v1002
    %v1026 = vxor.u32 %v1024, 2147483648
    %v1027 = vxor.u32 %v1025, 2147483648
    %v1028 = vmul.f32 %v1026, 1.442695
    %v1029 = vpow.pop %v1028
    %v1030 = vmul.f32 %v1027, 1.442695
    %v1031 = vpow.pop %v1030
    %v1032 = vadd.f32 %v1029, 1.0
    %v1033 = vadd.f32 %v1031, 1.0
    %v1034 = vrcp.pop %v1032
    %v1035 = vmul.f32 %v1032, %v1034
    %v1036 = vsub.f32 1.0, %v1035
    %v1037 = vmul.f32 %v1034, %v1036
    %v1038 = vadd.f32 %v1034, %v1037
    %vm1039 = vweird.f32 %v1032
    %vm1040 = vweird.f32 %v1034
    %vm1041 = vmor %vm1039, %vm1040
    %v1042 = vsel %vm1041, %v1034, %v1038
    %v1043 = vand.u32 2147483647, %v1032
    %vm1044 = vcmp.eq.f32.partialorder %v1043, 8.507059e+37
    %v1045 = vand.u32 %v1032, 2147483648
    %v1046 = vor.u32 1.1754944e-38, %v1045
    %v1047 = vsel %vm1044, %v1046, %v1042
    %v1048 = vmul.f32 1.0, %v1047
    %v1049 = vrcp.pop %v1033
    %v1050 = vmul.f32 %v1033, %v1049
    %v1051 = vsub.f32 1.0, %v1050
    %v1052 = vmul.f32 %v1049, %v1051
    %v1053 = vadd.f32 %v1049, %v1052
    %vm1054 = vweird.f32 %v1033
    %vm1055 = vweird.f32 %v1049
    %vm1056 = vmor %vm1054, %vm1055
    %v1057 = vsel %vm1056, %v1049, %v1053
    %v1058 = vand.u32 2147483647, %v1033
    %vm1059 = vcmp.eq.f32.partialorder %v1058, 8.507059e+37
    %v1060 = vand.u32 %v1033, 2147483648
    %v1061 = vor.u32 1.1754944e-38, %v1060
    %v1062 = vsel %vm1059, %v1061, %v1057
    %v1063 = vmul.f32 1.0, %v1062
    %v1064 = vmul.f32 %v1048, %v1022
    %v1065 = vadd.f32 %v915, %v1064
    %v1066 = vtanh.pop %v1065
    %v1067 = vsub.f32 1.0, %v1063
    %v1068 = vmul.f32 %v1067, %v1066
    %v1069 = vmul.f32 %v1063, %v911
    %v1070 = vadd.f32 %v1068, %v1069
    %1071 = vst [vmem:[#allocation3 + $0x20] sm:$0xff] %v1070
    %v1072 = vld [vmem:[#allocation2 + $0x78] sm:$0xff]
    %v1073 = vld [vmem:[#allocation2 + $0x80] sm:$0xff]
    %v1074 = vld [vmem:[#allocation2 + $0x88] sm:$0xff]
    %v1075 = vld [vmem:[#allocation4] sm:$0xff]
    %v1076 = vld [vmem:[#allocation4 + $0x8] sm:$0xff]
    %v1077 = vld [vmem:[#allocation4 + $0x10] sm:$0xff]
    %v1078 = vld [vmem:[#allocation4 + $0x18] sm:$0xff]
    %v1079 = vld [vmem:[#allocation4 + $0x20] sm:$0xff]
    %v1080 = vld [vmem:[#allocation4 + $0x28] sm:$0xff]
    %v1081 = vld [vmem:[#allocation4 + $0x30] sm:$0xff]
    %v1082 = vld [vmem:[#allocation4 + $0x38] sm:$0xff]
    %v1083 = vld [vmem:[#allocation4 + $0x40] sm:$0xff]
    %v1084 = vld [vmem:[#allocation4 + $0x48] sm:$0xff]
    %v1085 = vld [vmem:[#allocation4 + $0x50] sm:$0xff]
    %v1086 = vld [vmem:[#allocation4 + $0x58] sm:$0xff]
    %v1087 = vld [vmem:[#allocation4 + $0x60] sm:$0xff]
    %v1088 = vld [vmem:[#allocation4 + $0x68] sm:$0xff]
    %v1089 = vld [vmem:[#allocation4 + $0x70] sm:$0xff]
    %v1090 = vld [vmem:[#allocation4 + $0x78] sm:$0xff]
    %v1091 = vld [vmem:[#allocation4 + $0x80] sm:$0xff]
    %v1092 = vld [vmem:[#allocation4 + $0x88] sm:$0xff]
    %v1093 = vld [vmem:[#allocation4 + $0x90] sm:$0xff]
    %v1094 = vld [vmem:[#allocation4 + $0x98] sm:$0xff]
    %v1095 = vld [vmem:[#allocation4 + $0xa0] sm:$0xff]
    %v1096 = vld [vmem:[#allocation4 + $0xa8] sm:$0xff]
    %v1097 = vld [vmem:[#allocation4 + $0xb0] sm:$0xff]
    %v1098 = vld [vmem:[#allocation4 + $0xb8] sm:$0xff]
    %v1099 = vld [vmem:[#allocation4 + $0xc0] sm:$0xff]
    %v1100 = vld [vmem:[#allocation4 + $0xc8] sm:$0xff]
    %v1101 = vld [vmem:[#allocation4 + $0xd0] sm:$0xff]
    %v1102 = vld [vmem:[#allocation4 + $0xd8] sm:$0xff]
    %v1103 = vld [vmem:[#allocation4 + $0xe0] sm:$0xff]
    %v1104 = vld [vmem:[#allocation4 + $0xe8] sm:$0xff]
    %v1105 = vld [vmem:[#allocation4 + $0xf0] sm:$0xff]
    %v1106 = vld [vmem:[#allocation4 + $0xf8] sm:$0xff]
    %v1107 = vld [vmem:[#allocation4 + $0x100] sm:$0xff]
    %v1108 = vld [vmem:[#allocation4 + $0x108] sm:$0xff]
    %v1109 = vld [vmem:[#allocation4 + $0x110] sm:$0xff]
    %v1110 = vld [vmem:[#allocation4 + $0x118] sm:$0xff]
    %v1111 = vld [vmem:[#allocation4 + $0x120] sm:$0xff]
    %v1112 = vld [vmem:[#allocation4 + $0x128] sm:$0xff]
    %v1113 = vld [vmem:[#allocation4 + $0x130] sm:$0xff]
    %v1114 = vld [vmem:[#allocation4 + $0x138] sm:$0xff]
    %v1115 = vld [vmem:[#allocation4 + $0x140] sm:$0xff]
    %v1116 = vld [vmem:[#allocation4 + $0x148] sm:$0xff]
    %v1117 = vld [vmem:[#allocation4 + $0x150] sm:$0xff]
    %v1118 = vld [vmem:[#allocation4 + $0x158] sm:$0xff]
    %v1119 = vld [vmem:[#allocation4 + $0x160] sm:$0xff]
    %v1120 = vld [vmem:[#allocation4 + $0x168] sm:$0xff]
    %v1121 = vld [vmem:[#allocation4 + $0x170] sm:$0xff]
    %v1122 = vld [vmem:[#allocation4 + $0x178] sm:$0xff]
    %1123 = vmatpush.msra.mxu0 %v1120
    %1124 = vmatpush.msra.mxu0 %v1117
    %1125 = vmatpush.msra.mxu0 %v1114
    %1126 = vmatpush.msra.mxu0 %v1111
    %1127 = vmatpush.msra.mxu0 %v1108
    %1128 = vmatpush.msra.mxu0 %v1105
    %1129 = vmatpush.msra.mxu0 %v1102
    %1130 = vmatpush.msra.mxu0 %v1099
    %1131 = vmatpush.msra.mxu0 %v1096
    %1132 = vmatpush.msra.mxu0 %v1093
    %1133 = vmatpush.msra.mxu0 %v1090
    %1134 = vmatpush.msra.mxu0 %v1087
    %1135 = vmatpush.msra.mxu0 %v1084
    %1136 = vmatpush.msra.mxu0 %v1081
    %1137 = vmatpush.msra.mxu0 %v1078
    %1138 = vmatpush.msra.mxu0 %v1075
    %1139 = vmatmul.f32.gmra.mxu0 %v1070
    %v1140 = vpop.f32.mrf.mxu0
    %v1141 = vadd.f32 %v270, %v1140
    %1142 = vdwg.mxu0
    %1143 = vmatpush.msra.mxu0 %v1121
    %1144 = vmatpush.msra.mxu0 %v1118
    %1145 = vmatpush.msra.mxu0 %v1115
    %1146 = vmatpush.msra.mxu0 %v1112
    %1147 = vmatpush.msra.mxu0 %v1109
    %1148 = vmatpush.msra.mxu0 %v1106
    %1149 = vmatpush.msra.mxu0 %v1103
    %1150 = vmatpush.msra.mxu0 %v1100
    %1151 = vmatpush.msra.mxu0 %v1097
    %1152 = vmatpush.msra.mxu0 %v1094
    %1153 = vmatpush.msra.mxu0 %v1091
    %1154 = vmatpush.msra.mxu0 %v1088
    %1155 = vmatpush.msra.mxu0 %v1085
    %1156 = vmatpush.msra.mxu0 %v1082
    %1157 = vmatpush.msra.mxu0 %v1079
    %1158 = vmatpush.msra.mxu0 %v1076
    %1159 = vmatmul.f32.gmra.mxu0 %v1070
    %v1160 = vpop.f32.mrf.mxu0
    %v1161 = vadd.f32 %v271, %v1160
    %1162 = vdwg.mxu0
    %1163 = vmatpush.msra.mxu0 %v1122
    %1164 = vmatpush.msra.mxu0 %v1119
    %1165 = vmatpush.msra.mxu0 %v1116
    %1166 = vmatpush.msra.mxu0 %v1113
    %1167 = vmatpush.msra.mxu0 %v1110
    %1168 = vmatpush.msra.mxu0 %v1107
    %1169 = vmatpush.msra.mxu0 %v1104
    %1170 = vmatpush.msra.mxu0 %v1101
    %1171 = vmatpush.msra.mxu0 %v1098
    %1172 = vmatpush.msra.mxu0 %v1095
    %1173 = vmatpush.msra.mxu0 %v1092
    %1174 = vmatpush.msra.mxu0 %v1089
    %1175 = vmatpush.msra.mxu0 %v1086
    %1176 = vmatpush.msra.mxu0 %v1083
    %1177 = vmatpush.msra.mxu0 %v1080
    %1178 = vmatpush.msra.mxu0 %v1077
    %1179 = vmatmul.f32.gmra.mxu0 %v1070
    %v1180 = vpop.f32.mrf.mxu0
    %v1181 = vadd.f32 %v272, %v1180
    %1182 = vdwg.mxu0
    %v1183 = vadd.f32 %v1072, %v1141
    %v1184 = vadd.f32 %v1073, %v1161
    %v1185 = vxor.u32 %v1183, 2147483648
    %v1186 = vxor.u32 %v1184, 2147483648
    %v1187 = vmul.f32 %v1185, 1.442695
    %v1188 = vpow.pop %v1187
    %v1189 = vmul.f32 %v1186, 1.442695
    %v1190 = vpow.pop %v1189
    %v1191 = vadd.f32 %v1188, 1.0
    %v1192 = vadd.f32 %v1190, 1.0
    %v1193 = vrcp.pop %v1191
    %v1194 = vmul.f32 %v1191, %v1193
    %v1195 = vsub.f32 1.0, %v1194
    %v1196 = vmul.f32 %v1193, %v1195
    %v1197 = vadd.f32 %v1193, %v1196
    %vm1198 = vweird.f32 %v1191
    %vm1199 = vweird.f32 %v1193
    %vm1200 = vmor %vm1198, %vm1199
    %v1201 = vsel %vm1200, %v1193, %v1197
    %v1202 = vand.u32 2147483647, %v1191
    %vm1203 = vcmp.eq.f32.partialorder %v1202, 8.507059e+37
    %v1204 = vand.u32 %v1191, 2147483648
    %v1205 = vor.u32 1.1754944e-38, %v1204
    %v1206 = vsel %vm1203, %v1205, %v1201
    %v1207 = vmul.f32 1.0, %v1206
    %v1208 = vrcp.pop %v1192
    %v1209 = vmul.f32 %v1192, %v1208
    %v1210 = vsub.f32 1.0, %v1209
    %v1211 = vmul.f32 %v1208, %v1210
    %v1212 = vadd.f32 %v1208, %v1211
    %vm1213 = vweird.f32 %v1192
    %vm1214 = vweird.f32 %v1208
    %vm1215 = vmor %vm1213, %vm1214
    %v1216 = vsel %vm1215, %v1208, %v1212
    %v1217 = vand.u32 2147483647, %v1192
    %vm1218 = vcmp.eq.f32.partialorder %v1217, 8.507059e+37
    %v1219 = vand.u32 %v1192, 2147483648
    %v1220 = vor.u32 1.1754944e-38, %v1219
    %v1221 = vsel %vm1218, %v1220, %v1216
    %v1222 = vmul.f32 1.0, %v1221
    %v1223 = vmul.f32 %v1207, %v1181
    %v1224 = vadd.f32 %v1074, %v1223
    %v1225 = vtanh.pop %v1224
    %v1226 = vsub.f32 1.0, %v1222
    %v1227 = vmul.f32 %v1226, %v1225
    %v1228 = vmul.f32 %v1222, %v1070
    %v1229 = vadd.f32 %v1227, %v1228
    %1230 = vst [vmem:[#allocation3 + $0x28] sm:$0xff] %v1229
    %v1231 = vld [vmem:[#allocation2 + $0x90] sm:$0xff]
    %v1232 = vld [vmem:[#allocation2 + $0x98] sm:$0xff]
    %v1233 = vld [vmem:[#allocation2 + $0xa0] sm:$0xff]
    %v1234 = vld [vmem:[#allocation4] sm:$0xff]
    %v1235 = vld [vmem:[#allocation4 + $0x8] sm:$0xff]
    %v1236 = vld [vmem:[#allocation4 + $0x10] sm:$0xff]
    %v1237 = vld [vmem:[#allocation4 + $0x18] sm:$0xff]
    %v1238 = vld [vmem:[#allocation4 + $0x20] sm:$0xff]
    %v1239 = vld [vmem:[#allocation4 + $0x28] sm:$0xff]
    %v1240 = vld [vmem:[#allocation4 + $0x30] sm:$0xff]
    %v1241 = vld [vmem:[#allocation4 + $0x38] sm:$0xff]
    %v1242 = vld [vmem:[#allocation4 + $0x40] sm:$0xff]
    %v1243 = vld [vmem:[#allocation4 + $0x48] sm:$0xff]
    %v1244 = vld [vmem:[#allocation4 + $0x50] sm:$0xff]
    %v1245 = vld [vmem:[#allocation4 + $0x58] sm:$0xff]
    %v1246 = vld [vmem:[#allocation4 + $0x60] sm:$0xff]
    %v1247 = vld [vmem:[#allocation4 + $0x68] sm:$0xff]
    %v1248 = vld [vmem:[#allocation4 + $0x70] sm:$0xff]
    %v1249 = vld [vmem:[#allocation4 + $0x78] sm:$0xff]
    %v1250 = vld [vmem:[#allocation4 + $0x80] sm:$0xff]
    %v1251 = vld [vmem:[#allocation4 + $0x88] sm:$0xff]
    %v1252 = vld [vmem:[#allocation4 + $0x90] sm:$0xff]
    %v1253 = vld [vmem:[#allocation4 + $0x98] sm:$0xff]
    %v1254 = vld [vmem:[#allocation4 + $0xa0] sm:$0xff]
    %v1255 = vld [vmem:[#allocation4 + $0xa8] sm:$0xff]
    %v1256 = vld [vmem:[#allocation4 + $0xb0] sm:$0xff]
    %v1257 = vld [vmem:[#allocation4 + $0xb8] sm:$0xff]
    %v1258 = vld [vmem:[#allocation4 + $0xc0] sm:$0xff]
    %v1259 = vld [vmem:[#allocation4 + $0xc8] sm:$0xff]
    %v1260 = vld [vmem:[#allocation4 + $0xd0] sm:$0xff]
    %v1261 = vld [vmem:[#allocation4 + $0xd8] sm:$0xff]
    %v1262 = vld [vmem:[#allocation4 + $0xe0] sm:$0xff]
    %v1263 = vld [vmem:[#allocation4 + $0xe8] sm:$0xff]
    %v1264 = vld [vmem:[#allocation4 + $0xf0] sm:$0xff]
    %v1265 = vld [vmem:[#allocation4 + $0xf8] sm:$0xff]
    %v1266 = vld [vmem:[#allocation4 + $0x100] sm:$0xff]
    %v1267 = vld [vmem:[#allocation4 + $0x108] sm:$0xff]
    %v1268 = vld [vmem:[#allocation4 + $0x110] sm:$0xff]
    %v1269 = vld [vmem:[#allocation4 + $0x118] sm:$0xff]
    %v1270 = vld [vmem:[#allocation4 + $0x120] sm:$0xff]
    %v1271 = vld [vmem:[#allocation4 + $0x128] sm:$0xff]
    %v1272 = vld [vmem:[#allocation4 + $0x130] sm:$0xff]
    %v1273 = vld [vmem:[#allocation4 + $0x138] sm:$0xff]
    %v1274 = vld [vmem:[#allocation4 + $0x140] sm:$0xff]
    %v1275 = vld [vmem:[#allocation4 + $0x148] sm:$0xff]
    %v1276 = vld [vmem:[#allocation4 + $0x150] sm:$0xff]
    %v1277 = vld [vmem:[#allocation4 + $0x158] sm:$0xff]
    %v1278 = vld [vmem:[#allocation4 + $0x160] sm:$0xff]
    %v1279 = vld [vmem:[#allocation4 + $0x168] sm:$0xff]
    %v1280 = vld [vmem:[#allocation4 + $0x170] sm:$0xff]
    %v1281 = vld [vmem:[#allocation4 + $0x178] sm:$0xff]
    %1282 = vmatpush.msra.mxu0 %v1279
    %1283 = vmatpush.msra.mxu0 %v1276
    %1284 = vmatpush.msra.mxu0 %v1273
    %1285 = vmatpush.msra.mxu0 %v1270
    %1286 = vmatpush.msra.mxu0 %v1267
    %1287 = vmatpush.msra.mxu0 %v1264
    %1288 = vmatpush.msra.mxu0 %v1261
    %1289 = vmatpush.msra.mxu0 %v1258
    %1290 = vmatpush.msra.mxu0 %v1255
    %1291 = vmatpush.msra.mxu0 %v1252
    %1292 = vmatpush.msra.mxu0 %v1249
    %1293 = vmatpush.msra.mxu0 %v1246
    %1294 = vmatpush.msra.mxu0 %v1243
    %1295 = vmatpush.msra.mxu0 %v1240
    %1296 = vmatpush.msra.mxu0 %v1237
    %1297 = vmatpush.msra.mxu0 %v1234
    %1298 = vmatmul.f32.gmra.mxu0 %v1229
    %v1299 = vpop.f32.mrf.mxu0
    %v1300 = vadd.f32 %v270, %v1299
    %1301 = vdwg.mxu0
    %1302 = vmatpush.msra.mxu0 %v1280
    %1303 = vmatpush.msra.mxu0 %v1277
    %1304 = vmatpush.msra.mxu0 %v1274
    %1305 = vmatpush.msra.mxu0 %v1271
    %1306 = vmatpush.msra.mxu0 %v1268
    %1307 = vmatpush.msra.mxu0 %v1265
    %1308 = vmatpush.msra.mxu0 %v1262
    %1309 = vmatpush.msra.mxu0 %v1259
    %1310 = vmatpush.msra.mxu0 %v1256
    %1311 = vmatpush.msra.mxu0 %v1253
    %1312 = vmatpush.msra.mxu0 %v1250
    %1313 = vmatpush.msra.mxu0 %v1247
    %1314 = vmatpush.msra.mxu0 %v1244
    %1315 = vmatpush.msra.mxu0 %v1241
    %1316 = vmatpush.msra.mxu0 %v1238
    %1317 = vmatpush.msra.mxu0 %v1235
    %1318 = vmatmul.f32.gmra.mxu0 %v1229
    %v1319 = vpop.f32.mrf.mxu0
    %v1320 = vadd.f32 %v271, %v1319
    %1321 = vdwg.mxu0
    %1322 = vmatpush.msra.mxu0 %v1281
    %1323 = vmatpush.msra.mxu0 %v1278
    %1324 = vmatpush.msra.mxu0 %v1275
    %1325 = vmatpush.msra.mxu0 %v1272
    %1326 = vmatpush.msra.mxu0 %v1269
    %1327 = vmatpush.msra.mxu0 %v1266
    %1328 = vmatpush.msra.mxu0 %v1263
    %1329 = vmatpush.msra.mxu0 %v1260
    %1330 = vmatpush.msra.mxu0 %v1257
    %1331 = vmatpush.msra.mxu0 %v1254
    %1332 = vmatpush.msra.mxu0 %v1251
    %1333 = vmatpush.msra.mxu0 %v1248
    %1334 = vmatpush.msra.mxu0 %v1245
    %1335 = vmatpush.msra.mxu0 %v1242
    %1336 = vmatpush.msra.mxu0 %v1239
    %1337 = vmatpush.msra.mxu0 %v1236
    %1338 = vmatmul.f32.gmra.mxu0 %v1229
    %v1339 = vpop.f32.mrf.mxu0
    %v1340 = vadd.f32 %v272, %v1339
    %1341 = vdwg.mxu0
    %v1342 = vadd.f32 %v1231, %v1300
    %v1343 = vadd.f32 %v1232, %v1320
    %v1344 = vxor.u32 %v1342, 2147483648
    %v1345 = vxor.u32 %v1343, 2147483648
    %v1346 = vmul.f32 %v1344, 1.442695
    %v1347 = vpow.pop %v1346
    %v1348 = vmul.f32 %v1345, 1.442695
    %v1349 = vpow.pop %v1348
    %v1350 = vadd.f32 %v1347, 1.0
    %v1351 = vadd.f32 %v1349, 1.0
    %v1352 = vrcp.pop %v1350
    %v1353 = vmul.f32 %v1350, %v1352
    %v1354 = vsub.f32 1.0, %v1353
    %v1355 = vmul.f32 %v1352, %v1354
    %v1356 = vadd.f32 %v1352, %v1355
    %vm1357 = vweird.f32 %v1350
    %vm1358 = vweird.f32 %v1352
    %vm1359 = vmor %vm1357, %vm1358
    %v1360 = vsel %vm1359, %v1352, %v1356
    %v1361 = vand.u32 2147483647, %v1350
    %vm1362 = vcmp.eq.f32.partialorder %v1361, 8.507059e+37
    %v1363 = vand.u32 %v1350, 2147483648
    %v1364 = vor.u32 1.1754944e-38, %v1363
    %v1365 = vsel %vm1362, %v1364, %v1360
    %v1366 = vmul.f32 1.0, %v1365
    %v1367 = vrcp.pop %v1351
    %v1368 = vmul.f32 %v1351, %v1367
    %v1369 = vsub.f32 1.0, %v1368
    %v1370 = vmul.f32 %v1367, %v1369
    %v1371 = vadd.f32 %v1367, %v1370
    %vm1372 = vweird.f32 %v1351
    %vm1373 = vweird.f32 %v1367
    %vm1374 = vmor %vm1372, %vm1373
    %v1375 = vsel %vm1374, %v1367, %v1371
    %v1376 = vand.u32 2147483647, %v1351
    %vm1377 = vcmp.eq.f32.partialorder %v1376, 8.507059e+37
    %v1378 = vand.u32 %v1351, 2147483648
    %v1379 = vor.u32 1.1754944e-38, %v1378
    %v1380 = vsel %vm1377, %v1379, %v1375
    %v1381 = vmul.f32 1.0, %v1380
    %v1382 = vmul.f32 %v1366, %v1340
    %v1383 = vadd.f32 %v1233, %v1382
    %v1384 = vtanh.pop %v1383
    %v1385 = vsub.f32 1.0, %v1381
    %v1386 = vmul.f32 %v1385, %v1384
    %v1387 = vmul.f32 %v1381, %v1229
    %v1388 = vadd.f32 %v1386, %v1387
    %1389 = vst [vmem:[#allocation3 + $0x30] sm:$0xff] %v1388
    %v1390 = vld [vmem:[#allocation2 + $0xa8] sm:$0xff]
    %v1391 = vld [vmem:[#allocation2 + $0xb0] sm:$0xff]
    %v1392 = vld [vmem:[#allocation2 + $0xb8] sm:$0xff]
    %v1393 = vld [vmem:[#allocation4] sm:$0xff]
    %v1394 = vld [vmem:[#allocation4 + $0x8] sm:$0xff]
    %v1395 = vld [vmem:[#allocation4 + $0x10] sm:$0xff]
    %v1396 = vld [vmem:[#allocation4 + $0x18] sm:$0xff]
    %v1397 = vld [vmem:[#allocation4 + $0x20] sm:$0xff]
    %v1398 = vld [vmem:[#allocation4 + $0x28] sm:$0xff]
    %v1399 = vld [vmem:[#allocation4 + $0x30] sm:$0xff]
    %v1400 = vld [vmem:[#allocation4 + $0x38] sm:$0xff]
    %v1401 = vld [vmem:[#allocation4 + $0x40] sm:$0xff]
    %v1402 = vld [vmem:[#allocation4 + $0x48] sm:$0xff]
    %v1403 = vld [vmem:[#allocation4 + $0x50] sm:$0xff]
    %v1404 = vld [vmem:[#allocation4 + $0x58] sm:$0xff]
    %v1405 = vld [vmem:[#allocation4 + $0x60] sm:$0xff]
    %v1406 = vld [vmem:[#allocation4 + $0x68] sm:$0xff]
    %v1407 = vld [vmem:[#allocation4 + $0x70] sm:$0xff]
    %v1408 = vld [vmem:[#allocation4 + $0x78] sm:$0xff]
    %v1409 = vld [vmem:[#allocation4 + $0x80] sm:$0xff]
    %v1410 = vld [vmem:[#allocation4 + $0x88] sm:$0xff]
    %v1411 = vld [vmem:[#allocation4 + $0x90] sm:$0xff]
    %v1412 = vld [vmem:[#allocation4 + $0x98] sm:$0xff]
    %v1413 = vld [vmem:[#allocation4 + $0xa0] sm:$0xff]
    %v1414 = vld [vmem:[#allocation4 + $0xa8] sm:$0xff]
    %v1415 = vld [vmem:[#allocation4 + $0xb0] sm:$0xff]
    %v1416 = vld [vmem:[#allocation4 + $0xb8] sm:$0xff]
    %v1417 = vld [vmem:[#allocation4 + $0xc0] sm:$0xff]
    %v1418 = vld [vmem:[#allocation4 + $0xc8] sm:$0xff]
    %v1419 = vld [vmem:[#allocation4 + $0xd0] sm:$0xff]
    %v1420 = vld [vmem:[#allocation4 + $0xd8] sm:$0xff]
    %v1421 = vld [vmem:[#allocation4 + $0xe0] sm:$0xff]
    %v1422 = vld [vmem:[#allocation4 + $0xe8] sm:$0xff]
    %v1423 = vld [vmem:[#allocation4 + $0xf0] sm:$0xff]
    %v1424 = vld [vmem:[#allocation4 + $0xf8] sm:$0xff]
    %v1425 = vld [vmem:[#allocation4 + $0x100] sm:$0xff]
    %v1426 = vld [vmem:[#allocation4 + $0x108] sm:$0xff]
    %v1427 = vld [vmem:[#allocation4 + $0x110] sm:$0xff]
    %v1428 = vld [vmem:[#allocation4 + $0x118] sm:$0xff]
    %v1429 = vld [vmem:[#allocation4 + $0x120] sm:$0xff]
    %v1430 = vld [vmem:[#allocation4 + $0x128] sm:$0xff]
    %v1431 = vld [vmem:[#allocation4 + $0x130] sm:$0xff]
    %v1432 = vld [vmem:[#allocation4 + $0x138] sm:$0xff]
    %v1433 = vld [vmem:[#allocation4 + $0x140] sm:$0xff]
    %v1434 = vld [vmem:[#allocation4 + $0x148] sm:$0xff]
    %v1435 = vld [vmem:[#allocation4 + $0x150] sm:$0xff]
    %v1436 = vld [vmem:[#allocation4 + $0x158] sm:$0xff]
    %v1437 = vld [vmem:[#allocation4 + $0x160] sm:$0xff]
    %v1438 = vld [vmem:[#allocation4 + $0x168] sm:$0xff]
    %v1439 = vld [vmem:[#allocation4 + $0x170] sm:$0xff]
    %v1440 = vld [vmem:[#allocation4 + $0x178] sm:$0xff]
    %1441 = vmatpush.msra.mxu0 %v1438
    %1442 = vmatpush.msra.mxu0 %v1435
    %1443 = vmatpush.msra.mxu0 %v1432
    %1444 = vmatpush.msra.mxu0 %v1429
    %1445 = vmatpush.msra.mxu0 %v1426
    %1446 = vmatpush.msra.mxu0 %v1423
    %1447 = vmatpush.msra.mxu0 %v1420
    %1448 = vmatpush.msra.mxu0 %v1417
    %1449 = vmatpush.msra.mxu0 %v1414
    %1450 = vmatpush.msra.mxu0 %v1411
    %1451 = vmatpush.msra.mxu0 %v1408
    %1452 = vmatpush.msra.mxu0 %v1405
    %1453 = vmatpush.msra.mxu0 %v1402
    %1454 = vmatpush.msra.mxu0 %v1399
    %1455 = vmatpush.msra.mxu0 %v1396
    %1456 = vmatpush.msra.mxu0 %v1393
    %1457 = vmatmul.f32.gmra.mxu0 %v1388
    %v1458 = vpop.f32.mrf.mxu0
    %v1459 = vadd.f32 %v270, %v1458
    %1460 = vdwg.mxu0
    %1461 = vmatpush.msra.mxu0 %v1439
    %1462 = vmatpush.msra.mxu0 %v1436
    %1463 = vmatpush.msra.mxu0 %v1433
    %1464 = vmatpush.msra.mxu0 %v1430
    %1465 = vmatpush.msra.mxu0 %v1427
    %1466 = vmatpush.msra.mxu0 %v1424
    %1467 = vmatpush.msra.mxu0 %v1421
    %1468 = vmatpush.msra.mxu0 %v1418
    %1469 = vmatpush.msra.mxu0 %v1415
    %1470 = vmatpush.msra.mxu0 %v1412
    %1471 = vmatpush.msra.mxu0 %v1409
    %1472 = vmatpush.msra.mxu0 %v1406
    %1473 = vmatpush.msra.mxu0 %v1403
    %1474 = vmatpush.msra.mxu0 %v1400
    %1475 = vmatpush.msra.mxu0 %v1397
    %1476 = vmatpush.msra.mxu0 %v1394
    %1477 = vmatmul.f32.gmra.mxu0 %v1388
    %v1478 = vpop.f32.mrf.mxu0
    %v1479 = vadd.f32 %v271, %v1478
    %1480 = vdwg.mxu0
    %1481 = vmatpush.msra.mxu0 %v1440
    %1482 = vmatpush.msra.mxu0 %v1437
    %1483 = vmatpush.msra.mxu0 %v1434
    %1484 = vmatpush.msra.mxu0 %v1431
    %1485 = vmatpush.msra.mxu0 %v1428
    %1486 = vmatpush.msra.mxu0 %v1425
    %1487 = vmatpush.msra.mxu0 %v1422
    %1488 = vmatpush.msra.mxu0 %v1419
    %1489 = vmatpush.msra.mxu0 %v1416
    %1490 = vmatpush.msra.mxu0 %v1413
    %1491 = vmatpush.msra.mxu0 %v1410
    %1492 = vmatpush.msra.mxu0 %v1407
    %1493 = vmatpush.msra.mxu0 %v1404
    %1494 = vmatpush.msra.mxu0 %v1401
    %1495 = vmatpush.msra.mxu0 %v1398
    %1496 = vmatpush.msra.mxu0 %v1395
    %1497 = vmatmul.f32.gmra.mxu0 %v1388
    %v1498 = vpop.f32.mrf.mxu0
    %v1499 = vadd.f32 %v272, %v1498
    %1500 = vdwg.mxu0
    %v1501 = vadd.f32 %v1390, %v1459
    %v1502 = vadd.f32 %v1391, %v1479
    %v1503 = vxor.u32 %v1501, 2147483648
    %v1504 = vxor.u32 %v1502, 2147483648
    %v1505 = vmul.f32 %v1503, 1.442695
    %v1506 = vpow.pop %v1505
    %v1507 = vmul.f32 %v1504, 1.442695
    %v1508 = vpow.pop %v1507
    %v1509 = vadd.f32 %v1506, 1.0
    %v1510 = vadd.f32 %v1508, 1.0
    %v1511 = vrcp.pop %v1509
    %v1512 = vmul.f32 %v1509, %v1511
    %v1513 = vsub.f32 1.0, %v1512
    %v1514 = vmul.f32 %v1511, %v1513
    %v1515 = vadd.f32 %v1511, %v1514
    %vm1516 = vweird.f32 %v1509
    %vm1517 = vweird.f32 %v1511
    %vm1518 = vmor %vm1516, %vm1517
    %v1519 = vsel %vm1518, %v1511, %v1515
    %v1520 = vand.u32 2147483647, %v1509
    %vm1521 = vcmp.eq.f32.partialorder %v1520, 8.507059e+37
    %v1522 = vand.u32 %v1509, 2147483648
    %v1523 = vor.u32 1.1754944e-38, %v1522
    %v1524 = vsel %vm1521, %v1523, %v1519
    %v1525 = vmul.f32 1.0, %v1524
    %v1526 = vrcp.pop %v1510
    %v1527 = vmul.f32 %v1510, %v1526
    %v1528 = vsub.f32 1.0, %v1527
    %v1529 = vmul.f32 %v1526, %v1528
    %v1530 = vadd.f32 %v1526, %v1529
    %vm1531 = vweird.f32 %v1510
    %vm1532 = vweird.f32 %v1526
    %vm1533 = vmor %vm1531, %vm1532
    %v1534 = vsel %vm1533, %v1526, %v1530
    %v1535 = vand.u32 2147483647, %v1510
    %vm1536 = vcmp.eq.f32.partialorder %v1535, 8.507059e+37
    %v1537 = vand.u32 %v1510, 2147483648
    %v1538 = vor.u32 1.1754944e-38, %v1537
    %v1539 = vsel %vm1536, %v1538, %v1534
    %v1540 = vmul.f32 1.0, %v1539
    %v1541 = vmul.f32 %v1525, %v1499
    %v1542 = vadd.f32 %v1392, %v1541
    %v1543 = vtanh.pop %v1542
    %v1544 = vsub.f32 1.0, %v1540
    %v1545 = vmul.f32 %v1544, %v1543
    %v1546 = vmul.f32 %v1540, %v1388
    %v1547 = vadd.f32 %v1545, %v1546
    %1548 = vst [vmem:[#allocation3 + $0x38] sm:$0xff] %v1547
    %1549 = vst [vmem:[#allocation10] sm:$0xff] %v1547
    %v1550 = vld [vmem:[#allocation3] sm:$0xff]
    %v1551 = vld [vmem:[#allocation3 + $0x8] sm:$0xff]
    %v1552 = vld [vmem:[#allocation3 + $0x10] sm:$0xff]
    %v1553 = vld [vmem:[#allocation3 + $0x18] sm:$0xff]
    %v1554 = vld [vmem:[#allocation3 + $0x20] sm:$0xff]
    %v1555 = vld [vmem:[#allocation3 + $0x28] sm:$0xff]
    %v1556 = vld [vmem:[#allocation3 + $0x30] sm:$0xff]
    %v1557 = vld [vmem:[#allocation3 + $0x38] sm:$0xff]
    %v1558 = vld [vmem:[#allocation7] sm:$0xff]
    %v1559 = vld [vmem:[#allocation7 + $0x8] sm:$0xff]
    %v1560 = vld [vmem:[#allocation7 + $0x10] sm:$0xff]
    %v1561 = vld [vmem:[#allocation7 + $0x18] sm:$0xff]
    %v1562 = vld [vmem:[#allocation7 + $0x20] sm:$0xff]
    %v1563 = vld [vmem:[#allocation7 + $0x28] sm:$0xff]
    %v1564 = vld [vmem:[#allocation7 + $0x30] sm:$0xff]
    %v1565 = vld [vmem:[#allocation7 + $0x38] sm:$0xff]
    %v1566 = vld [vmem:[#allocation7 + $0x40] sm:$0xff]
    %v1567 = vld [vmem:[#allocation7 + $0x48] sm:$0xff]
    %v1568 = vld [vmem:[#allocation7 + $0x50] sm:$0xff]
    %v1569 = vld [vmem:[#allocation7 + $0x58] sm:$0xff]
    %v1570 = vld [vmem:[#allocation7 + $0x60] sm:$0xff]
    %v1571 = vld [vmem:[#allocation7 + $0x68] sm:$0xff]
    %v1572 = vld [vmem:[#allocation7 + $0x70] sm:$0xff]
    %v1573 = vld [vmem:[#allocation7 + $0x78] sm:$0xff]
    %v1574 = vld [vmem:[%s5] sm:$0x1]
    %v1576 = vperm.slane %v1574, 0
    %1578 = vmatpush.msra.mxu0 %v1573
    %1579 = vmatpush.msra.mxu0 %v1572
    %1580 = vmatpush.msra.mxu0 %v1571
    %1581 = vmatpush.msra.mxu0 %v1570
    %1582 = vmatpush.msra.mxu0 %v1569
    %1583 = vmatpush.msra.mxu0 %v1568
    %1584 = vmatpush.msra.mxu0 %v1567
    %1585 = vmatpush.msra.mxu0 %v1566
    %1586 = vmatpush.msra.mxu0 %v1565
    %1587 = vmatpush.msra.mxu0 %v1564
    %1588 = vmatpush.msra.mxu0 %v1563
    %1589 = vmatpush.msra.mxu0 %v1562
    %1590 = vmatpush.msra.mxu0 %v1561
    %1591 = vmatpush.msra.mxu0 %v1560
    %1592 = vmatpush.msra.mxu0 %v1559
    %1593 = vmatpush.msra.mxu0 %v1558
    %1594 = vmatmul.f32.gmra.mxu0 %v1550
    %v1595 = vpop.f32.mrf.mxu0
    %v1596 = vadd.f32 %v1576, %v1595
    %1597 = vmatmul.f32.gmra.mxu0 %v1551
    %v1598 = vpop.f32.mrf.mxu0
    %v1599 = vadd.f32 %v1576, %v1598
    %1600 = vmatmul.f32.gmra.mxu0 %v1552
    %v1601 = vpop.f32.mrf.mxu0
    %v1602 = vadd.f32 %v1576, %v1601
    %1603 = vmatmul.f32.gmra.mxu0 %v1553
    %v1604 = vpop.f32.mrf.mxu0
    %v1605 = vadd.f32 %v1576, %v1604
    %1606 = vmatmul.f32.gmra.mxu0 %v1554
    %v1607 = vpop.f32.mrf.mxu0
    %v1608 = vadd.f32 %v1576, %v1607
    %1609 = vmatmul.f32.gmra.mxu0 %v1555
    %v1610 = vpop.f32.mrf.mxu0
    %v1611 = vadd.f32 %v1576, %v1610
    %1612 = vmatmul.f32.gmra.mxu0 %v1556
    %v1613 = vpop.f32.mrf.mxu0
    %v1614 = vadd.f32 %v1576, %v1613
    %1615 = vmatmul.f32.gmra.mxu0 %v1557
    %v1616 = vpop.f32.mrf.mxu0
    %v1617 = vadd.f32 %v1576, %v1616
    %1618 = vdwg.mxu0
    %1619 = vst [vmem:[#allocation9] sm:$0xff] %v1596
    %1620 = vst [vmem:[#allocation9 + $0x8] sm:$0xff] %v1599
    %1621 = vst [vmem:[#allocation9 + $0x10] sm:$0xff] %v1602
    %1622 = vst [vmem:[#allocation9 + $0x18] sm:$0xff] %v1605
    %1623 = vst [vmem:[#allocation9 + $0x20] sm:$0xff] %v1608
    %1624 = vst [vmem:[#allocation9 + $0x28] sm:$0xff] %v1611
    %1625 = vst [vmem:[#allocation9 + $0x30] sm:$0xff] %v1614
    %1626 = vst [vmem:[#allocation9 + $0x38] sm:$0xff] %v1617
    // Predicated region
    $region38: #{tpu_custom_call.1} parent=1 // pred_check
      _
    $region39: #{tpu_custom_call.1} parent=1 // pred_check_branch
      %1628 = sbr.rel (0) target = $region41
    $region40: #{tpu_custom_call.1} parent=1 // pred_region
      %1630 = vsyncadd [#allocation6], 0
      %s1631 = sshll.u32 [#allocation9], 4
      %s1632 = int_to_ptr.vmem [resolvable:$true] %s1631
      %s1633 = sshll.u32 %s7, 4
      %s1634 = int_to_ptr.hbm [resolvable:$true] %s1633
      %1639 = dma.vmem_to_hbm [thread:$0]  %s1632, 1024, %s1634, [#allocation6], 128, 128, 8
    $region41: #{tpu_custom_call.1} parent=1 // pred_fallthru
      _
    // Predicated region
    $region42: #{tpu_custom_call.1} parent=1 // pred_check
      _
    $region43: #{tpu_custom_call.1} parent=1 // pred_check_branch
      %1641 = sbr.rel (0) target = $region45
    $region44: #{tpu_custom_call.1} parent=1 // pred_region
      %1643 = vsyncadd [#allocation11], 0
      %s1645 = sshll.u32 [#allocation10], 4
      %s1646 = int_to_ptr.vmem [resolvable:$true] %s1645
      %s1647 = sshll.u32 %s8, 4
      %s1648 = int_to_ptr.hbm [resolvable:$true] %s1647
      %1650 = dma.vmem_to_hbm [thread:$0]  %s1646, 128, %s1648, [#allocation11]
    $region45: #{tpu_custom_call.1} parent=1 // pred_fallthru
      _
    // Predicated region
    $region46: #{tpu_custom_call.1} parent=1 // pred_check
      _
    $region47: #{tpu_custom_call.1} parent=1 // pred_check_branch
      %1652 = sbr.rel (0) target = $region49
    $region48: #{tpu_custom_call.1} parent=1 // pred_region
      %1654 = dma.done [#allocation6], 1024
    $region49: #{tpu_custom_call.1} parent=1 // pred_fallthru
      _
    // Predicated region
    $region50: #{tpu_custom_call.1} parent=1 // pred_check
      _
    $region51: #{tpu_custom_call.1} parent=1 // pred_check_branch
      %1656 = sbr.rel (0) target = $region53
    $region52: #{tpu_custom_call.1} parent=1 // pred_region
      %1658 = dma.done [#allocation11], 128
    $region53: #{tpu_custom_call.1} parent=1 // pred_fallthru
      _
    %1659 = vsyncpa [#allocation5], 1
    %1660 = vsyncpa [#allocation8], 1
    %1661 = vsyncpa [#allocation6], 1
    %1662 = vsyncpa [#allocation11], 1

</llo_original>
